<compile_context>
chip_gen: v7x
topology: tpu7x:2x2x1
jax: 0.10.0
libtpu: 0.0.40
codegen_flags: <defaults>
</compile_context>

<pallas_src>
import math
import functools

import jax
import jax.numpy as jnp
from jax.experimental import pallas as pl
from jax.experimental.pallas import tpu as pltpu


def mha_kernel(q_ref, k_ref, v_ref,
               wq_ref, wk_ref, wv_ref, wfc_ref,
               g1_ref, b1_ref, g2_ref, b2_ref,
               res_ref, attn_ref,
               out_sc,
               *, n_head, d_k, d_v, eps):
    """One (batch_block, q_tile) step."""
    BB, TQ, d_q = q_ref.shape
    _, n_k, d_kv = k_ref.shape

    # Inputs arrive as bf16 (half the input DMA).  Upcast once to f32 for the
    # residual and do all value reshapes on f32 (proven lowering path); cast
    # back to bf16 right at the MXU inputs (cheap VPU pass, tiny vs. matmuls).
    resid = q_ref[...].astype(jnp.float32).reshape(BB * TQ, d_q)        # f32 residual
    q2 = resid.astype(jnp.bfloat16)
    k2 = k_ref[...].astype(jnp.float32).reshape(BB * n_k, d_kv).astype(jnp.bfloat16)
    v2 = v_ref[...].astype(jnp.float32).reshape(BB * n_k, d_kv).astype(jnp.bfloat16)

    # Projections: one tall (BB*seq, d) matmul each, bf16 inputs, f32 acc.
    qp = jnp.dot(q2, wq_ref[...], preferred_element_type=jnp.float32)   # (BB*TQ, H*d_k)
    kp = jnp.dot(k2, wk_ref[...], preferred_element_type=jnp.float32)   # (BB*n_k, H*d_k)
    vp = jnp.dot(v2, wv_ref[...], preferred_element_type=jnp.float32)   # (BB*n_k, H*d_v)

    # Fold 1/sqrt(d_k) into Q once instead of scaling every (TQ, n_k) tile.
    qp = (qp * (1.0 / math.sqrt(d_k))).reshape(BB, TQ, n_head * d_k).astype(jnp.bfloat16)
    kp = kp.reshape(BB, n_k, n_head * d_k).astype(jnp.bfloat16)
    vp = vp.reshape(BB, n_k, n_head * d_v).astype(jnp.bfloat16)

    # Static loop over (few) heads; inside each head the contractions are
    # batched over the whole batch block with single-batch-dim einsums.
    for h in range(n_head):
        qh = qp[:, :, h * d_k:(h + 1) * d_k]        # (BB, TQ, d_k)
        kh = kp[:, :, h * d_k:(h + 1) * d_k]        # (BB, n_k, d_k)
        vh = vp[:, :, h * d_v:(h + 1) * d_v]        # (BB, n_k, d_v)

        scores = jnp.einsum('bqd,bkd->bqk', qh, kh,
                            preferred_element_type=jnp.float32)         # (BB,TQ,n_k)

        # Numerically stable softmax in f32.  Exact reciprocal so the stored
        # attention rows sum to 1; the same probabilities feed the PV matmul.
        m = jnp.max(scores, axis=-1, keepdims=True)
        e = jnp.exp(scores - m)
        denom = jnp.sum(e, axis=-1, keepdims=True)
        attn_h = e * pl.reciprocal(denom, approx=False)                 # (BB,TQ,n_k)
        attn_ref[:, h, :, :] = attn_h.astype(attn_ref.dtype)

        oh = jnp.einsum('bqk,bkd->bqd', attn_h.astype(jnp.bfloat16), vh,
                        preferred_element_type=jnp.float32)             # (BB,TQ,d_v)
        # Write directly into the VMEM slab: bounds the per-head live range
        # and removes the minor-axis concatenate.
        out_sc[:, h * d_v:(h + 1) * d_v] = oh.reshape(BB * TQ, d_v)

    out = out_sc[...]                                                    # (BB*TQ, H*d_v)

    # ---- residual + LayerNorm1 (f32, flattened slab).
    s = resid + out
    mu1 = jnp.mean(s, axis=-1, keepdims=True)
    var1 = jnp.mean((s - mu1) ** 2, axis=-1, keepdims=True)
    s = (s - mu1) * jax.lax.rsqrt(var1 + eps) * g1_ref[...] + b1_ref[...]

    # ---- fc + residual + LayerNorm2 (matmul in bf16, stats in f32).
    t = s + jnp.dot(s.astype(jnp.bfloat16), wfc_ref[...],
                    preferred_element_type=jnp.float32)
    mu2 = jnp.mean(t, axis=-1, keepdims=True)
    var2 = jnp.mean((t - mu2) ** 2, axis=-1, keepdims=True)
    r = (t - mu2) * jax.lax.rsqrt(var2 + eps) * g2_ref[...] + b2_ref[...]

    res_ref[...] = r.reshape(BB, TQ, d_q)


def _vmem_caps():
    """(block-search budget, scoped vmem limit) per generation."""
    cap = 64 << 20                       # assume the smallest (v7x) if query fails
    try:
        info = pltpu.get_tpu_info()
        cap = int(getattr(info, "vmem_capacity_bytes", cap))
    except Exception:
        pass
    budget = max(12 << 20, int(cap * 0.4))                 # ~25 MiB v7x, ~51 MiB v5e/v6e
    limit = max(32 << 20, min(int(cap * 0.75), 100 << 20))  # ~48 MiB v7x, ~96 MiB v5e/v6e
    return budget, limit


def _pick_q_tile(n_q, target=256):
    """Largest q-tile <= target that divides n_q (multiple of 8 when < n_q)."""
    if n_q <= target:
        return n_q
    for t in range(target, 7, -8):       # 256, 248, ..., 8 -> sublane-aligned
        if n_q % t == 0:
            return t
    return n_q


def _pick_batch_block(B, tq, n_q_tiles, n_k, d_q, d_kv, n_head, d_k, d_v,
                      attn_bytes, budget_bytes):
    """Largest divisor BB of B whose per-step VMEM footprint (double-buffered
    blocks + weights + in-kernel intermediates, counted generously) fits the
    per-generation budget, while keeping >= 2 total grid steps so both v7x
    TensorCores get work (costs at most one extra ~0.35us step elsewhere)."""
    d_proj = n_head * d_k
    d_out = n_head * d_v
    # bf16 weights, double-buffered.
    w_bytes = 2 * 2 * (d_q * d_proj + d_kv * d_proj + d_kv * d_out + d_out * d_q)

    def footprint(bb):
        in_blocks = 2 * 2 * bb * (tq * d_q + 2 * n_k * d_kv)            # bf16, x2 buf
        out_blocks = 2 * (4 * bb * tq * d_q + attn_bytes * bb * n_head * tq * n_k)
        scratch = 4 * bb * tq * d_out
        # f32 qp/kp/vp + their bf16 copies (~1.5x f32) of projected activations.
        proj = 6 * bb * (tq * d_proj + n_k * d_proj + n_k * d_out)
        # per-head f32 scores / exp / attn tiles live simultaneously.
        soft = 3 * 4 * bb * tq * n_k
        return w_bytes + in_blocks + out_blocks + scratch + proj + soft

    best = 1
    for bb in range(1, B + 1):
        if B % bb:
            continue
        if B * n_q_tiles >= 2 and (B // bb) * n_q_tiles < 2:
            continue                                   # keep >= 2 grid steps
        if footprint(bb) <= budget_bytes:
            best = bb
    return best


def multi_head_attention(q, k, v, params, *, n_head, d_k, d_v, eps=1e-6,
                         attn_dtype=jnp.float32):
    B, n_q, d_model_q = q.shape
    _, n_k, d_model_kv = k.shape
    assert d_model_q == n_head * d_v, "module requires d_model_q == n_head*d_v (residual add)"

    wq_t, wk_t, wv_t, wfc_t, g1, b1, g2, b2 = params

    # bf16 activations + weights in HBM (halves per-step input DMA / buffers);
    # LayerNorm params stay f32 and become (1, dim) for clean VMEM broadcast.
    qb = q.astype(jnp.bfloat16)
    kb = k.astype(jnp.bfloat16)
    vb = v.astype(jnp.bfloat16)
    wq_b = wq_t.astype(jnp.bfloat16)
    wk_b = wk_t.astype(jnp.bfloat16)
    wv_b = wv_t.astype(jnp.bfloat16)
    wfc_b = wfc_t.astype(jnp.bfloat16)
    g1 = g1.reshape(1, -1).astype(jnp.float32)
    b1 = b1.reshape(1, -1).astype(jnp.float32)
    g2 = g2.reshape(1, -1).astype(jnp.float32)
    b2 = b2.reshape(1, -1).astype(jnp.float32)

    budget, vmem_limit = _vmem_caps()
    TQ = _pick_q_tile(n_q)
    n_q_tiles = n_q // TQ
    attn_bytes = jnp.dtype(attn_dtype).itemsize
    BB = _pick_batch_block(B, TQ, n_q_tiles, n_k, d_model_q, d_model_kv,
                           n_head, d_k, d_v, attn_bytes, budget)
    grid = (B // BB, n_q_tiles)

    kernel = functools.partial(mha_kernel, n_head=n_head, d_k=d_k, d_v=d_v, eps=eps)

    def full_spec(arr):
        nd = arr.ndim
        return pl.BlockSpec(arr.shape, lambda b, t, _nd=nd: (0,) * _nd)

    res, attn = pl.pallas_call(
        kernel,
        out_shape=(
            jax.ShapeDtypeStruct((B, n_q, d_model_q), jnp.float32),
            jax.ShapeDtypeStruct((B, n_head, n_q, n_k), attn_dtype),
        ),
        grid=grid,
        in_specs=[
            pl.BlockSpec((BB, TQ, d_model_q), lambda b, t: (b, t, 0)),
            pl.BlockSpec((BB, n_k, d_model_kv), lambda b, t: (b, 0, 0)),
            pl.BlockSpec((BB, n_k, d_model_kv), lambda b, t: (b, 0, 0)),
            full_spec(wq_b), full_spec(wk_b), full_spec(wv_b), full_spec(wfc_b),
            full_spec(g1), full_spec(b1), full_spec(g2), full_spec(b2),
        ],
        out_specs=(
            pl.BlockSpec((BB, TQ, d_model_q), lambda b, t: (b, t, 0)),
            pl.BlockSpec((BB, n_head, TQ, n_k), lambda b, t: (b, 0, t, 0)),
        ),
        scratch_shapes=[pltpu.VMEM((BB * TQ, n_head * d_v), jnp.float32)],
        compiler_params=pltpu.CompilerParams(
            dimension_semantics=("parallel", "parallel"),
            vmem_limit_bytes=int(vmem_limit)),
    )(qb, kb, vb, wq_b, wk_b, wv_b, wfc_b, g1, b1, g2, b2)
    return res, attn


def reference(q, k, v, params, *, n_head, d_k, d_v, eps=1e-6):
    """Pure-JAX f32 reference mirroring the PyTorch forward."""
    wq_t, wk_t, wv_t, wfc_t, g1, b1, g2, b2 = params
    B, n_q, _ = q.shape
    n_k = k.shape[1]
    residual = q
    qp = (q @ wq_t).reshape(B, n_q, n_head, d_k).transpose(0, 2, 1, 3)
    kp = (k @ wk_t).reshape(B, n_k, n_head, d_k).transpose(0, 2, 1, 3)
    vp = (v @ wv_t).reshape(B, n_k, n_head, d_v).transpose(0, 2, 1, 3)
    attn = jax.nn.softmax(qp @ kp.transpose(0, 1, 3, 2) / math.sqrt(d_k), axis=-1)
    out = (attn @ vp).transpose(0, 2, 1, 3).reshape(B, n_q, n_head * d_v)

    def ln(x, g, b):
        mu = x.mean(-1, keepdims=True)
        var = ((x - mu) ** 2).mean(-1, keepdims=True)
        return (x - mu) / jnp.sqrt(var + eps) * g + b

    s = ln(residual + out, g1, b1)
    res = ln(s + s @ wfc_t, g2, b2)
    return res, attn


if __name__ == "__main__":
    # Small shapes consistent with the module: residual-add forces
    # d_model_q == n_head * d_v.
    n_head, d_k, d_v = 2, 8, 16
    d_model_q = n_head * d_v          # 32
    d_model_kv = 24
    B, n_q, n_k = 4, 8, 8

    key = jax.random.PRNGKey(0)
    keys = jax.random.split(key, 7)
    q = jax.random.normal(keys[0], (B, n_q, d_model_q), jnp.float32)
    k = jax.random.normal(keys[1], (B, n_k, d_model_kv), jnp.float32)
    v = jax.random.normal(keys[2], (B, n_k, d_model_kv), jnp.float32)

    # nn.Linear weights stored transposed: (d_in, d_out).
    wq_t = 0.1 * jax.random.normal(keys[3], (d_model_q, n_head * d_k), jnp.float32)
    wk_t = 0.1 * jax.random.normal(keys[4], (d_model_kv, n_head * d_k), jnp.float32)
    wv_t = 0.1 * jax.random.normal(keys[5], (d_model_kv, n_head * d_v), jnp.float32)
    wfc_t = 0.1 * jax.random.normal(keys[6], (n_head * d_v, d_model_q), jnp.float32)
    g1 = jnp.ones((n_head * d_v,), jnp.float32)
    b1 = jnp.zeros((n_head * d_v,), jnp.float32)
    g2 = jnp.ones((d_model_q,), jnp.float32)
    b2 = jnp.zeros((d_model_q,), jnp.float32)
    params = (wq_t, wk_t, wv_t, wfc_t, g1, b1, g2, b2)

    res, attn = multi_head_attention(q, k, v, params, n_head=n_head, d_k=d_k, d_v=d_v)
    jax.block_until_ready((res, attn))

    res_ref, attn_ref_v = reference(q, k, v, params, n_head=n_head, d_k=d_k, d_v=d_v)
    # bf16 HBM inputs + bf16 MXU matmuls vs. f32 reference => loosened
    # tolerances (semantics unchanged; softmax / LayerNorm stats stay f32).
    assert jnp.allclose(attn, attn_ref_v, atol=2e-2, rtol=2e-2), \
        float(jnp.max(jnp.abs(attn - attn_ref_v)))
    assert jnp.allclose(res, res_ref, atol=4e-2, rtol=4e-2), \
        float(jnp.max(jnp.abs(res - res_ref)))
    print("KERNEL_OK")
</pallas_src>

<mosaic_0001>
module attributes {stable_mosaic.version = 11 : i64} {
  func.func @mha_kernel(%arg0: i32, %arg1: i32, %arg2: memref<2x8x32xbf16, #tpu.memory_space<vmem>>, %arg3: memref<2x8x24xbf16, #tpu.memory_space<vmem>>, %arg4: memref<2x8x24xbf16, #tpu.memory_space<vmem>>, %arg5: memref<32x16xbf16, #tpu.memory_space<vmem>>, %arg6: memref<24x16xbf16, #tpu.memory_space<vmem>>, %arg7: memref<24x32xbf16, #tpu.memory_space<vmem>>, %arg8: memref<32x32xbf16, #tpu.memory_space<vmem>>, %arg9: memref<1x32xf32, #tpu.memory_space<vmem>>, %arg10: memref<1x32xf32, #tpu.memory_space<vmem>>, %arg11: memref<1x32xf32, #tpu.memory_space<vmem>>, %arg12: memref<1x32xf32, #tpu.memory_space<vmem>>, %arg13: memref<2x8x32xf32, #tpu.memory_space<vmem>>, %arg14: memref<2x2x8x8xf32, #tpu.memory_space<vmem>>, %arg15: memref<16x32xf32, #tpu.memory_space<vmem>>) attributes {dimension_semantics = [#tpu.dimension_semantics<parallel>, #tpu.dimension_semantics<parallel>], iteration_bounds = array<i64: 2, 1>, scalar_prefetch = 0 : i64, scratch_operands = 1 : i64, tpu.core_type = #tpu.core_type<tc>, window_params = [{transform_indices = @transform_0, window_bounds = array<i64: 2, 8, 32>}, {transform_indices = @transform_1, window_bounds = array<i64: 2, 8, 24>}, {transform_indices = @transform_2, window_bounds = array<i64: 2, 8, 24>}, {pipeline_mode = #tpu.pipeline_mode<synchronous>, transform_indices = @transform_3, window_bounds = array<i64: 32, 16>}, {pipeline_mode = #tpu.pipeline_mode<synchronous>, transform_indices = @transform_4, window_bounds = array<i64: 24, 16>}, {pipeline_mode = #tpu.pipeline_mode<synchronous>, transform_indices = @transform_5, window_bounds = array<i64: 24, 32>}, {pipeline_mode = #tpu.pipeline_mode<synchronous>, transform_indices = @transform_6, window_bounds = array<i64: 32, 32>}, {pipeline_mode = #tpu.pipeline_mode<synchronous>, transform_indices = @transform_7, window_bounds = array<i64: 1, 32>}, {pipeline_mode = #tpu.pipeline_mode<synchronous>, transform_indices = @transform_8, window_bounds = array<i64: 1, 32>}, {pipeline_mode = #tpu.pipeline_mode<synchronous>, transform_indices = @transform_9, window_bounds = array<i64: 1, 32>}, {pipeline_mode = #tpu.pipeline_mode<synchronous>, transform_indices = @transform_10, window_bounds = array<i64: 1, 32>}, {transform_indices = @transform_11, window_bounds = array<i64: 2, 8, 32>}, {transform_indices = @transform_12, window_bounds = array<i64: 2, 2, 8, 8>}]} {
    %c0 = arith.constant 0 : index
    %c0_0 = arith.constant 0 : index
    %c0_1 = arith.constant 0 : index
    %0 = vector.load %arg2[%c0, %c0_0, %c0_1] : memref<2x8x32xbf16, #tpu.memory_space<vmem>>, vector<2x8x32xbf16>
    %1 = arith.extf %0 : vector<2x8x32xbf16> to vector<2x8x32xf32>
    %2 = vector.shape_cast %1 : vector<2x8x32xf32> to vector<16x32xf32>
    %3 = arith.truncf %2 : vector<16x32xf32> to vector<16x32xbf16>
    %c0_2 = arith.constant 0 : index
    %c0_3 = arith.constant 0 : index
    %c0_4 = arith.constant 0 : index
    %4 = vector.load %arg3[%c0_2, %c0_3, %c0_4] : memref<2x8x24xbf16, #tpu.memory_space<vmem>>, vector<2x8x24xbf16>
    %5 = arith.extf %4 : vector<2x8x24xbf16> to vector<2x8x24xf32>
    %6 = vector.shape_cast %5 : vector<2x8x24xf32> to vector<16x24xf32>
    %7 = arith.truncf %6 : vector<16x24xf32> to vector<16x24xbf16>
    %c0_5 = arith.constant 0 : index
    %c0_6 = arith.constant 0 : index
    %c0_7 = arith.constant 0 : index
    %8 = vector.load %arg4[%c0_5, %c0_6, %c0_7] : memref<2x8x24xbf16, #tpu.memory_space<vmem>>, vector<2x8x24xbf16>
    %9 = arith.extf %8 : vector<2x8x24xbf16> to vector<2x8x24xf32>
    %10 = vector.shape_cast %9 : vector<2x8x24xf32> to vector<16x24xf32>
    %11 = arith.truncf %10 : vector<16x24xf32> to vector<16x24xbf16>
    %c0_8 = arith.constant 0 : index
    %c0_9 = arith.constant 0 : index
    %12 = vector.load %arg5[%c0_8, %c0_9] : memref<32x16xbf16, #tpu.memory_space<vmem>>, vector<32x16xbf16>
    %cst = arith.constant dense<0.000000e+00> : vector<16x16xf32>
    %13 = tpu.matmul %3, %12, %cst {dimension_numbers = #tpu.dot_dimension_numbers<[1], [0], [0], [1], [0, 0, 1, 1], [], []>} : vector<16x32xbf16>, vector<32x16xbf16>, vector<16x16xf32> -> vector<16x16xf32>
    %c0_10 = arith.constant 0 : index
    %c0_11 = arith.constant 0 : index
    %14 = vector.load %arg6[%c0_10, %c0_11] : memref<24x16xbf16, #tpu.memory_space<vmem>>, vector<24x16xbf16>
    %cst_12 = arith.constant dense<0.000000e+00> : vector<16x16xf32>
    %15 = tpu.matmul %7, %14, %cst_12 {dimension_numbers = #tpu.dot_dimension_numbers<[1], [0], [0], [1], [0, 0, 1, 1], [], []>} : vector<16x24xbf16>, vector<24x16xbf16>, vector<16x16xf32> -> vector<16x16xf32>
    %c0_13 = arith.constant 0 : index
    %c0_14 = arith.constant 0 : index
    %16 = vector.load %arg7[%c0_13, %c0_14] : memref<24x32xbf16, #tpu.memory_space<vmem>>, vector<24x32xbf16>
    %cst_15 = arith.constant dense<0.000000e+00> : vector<16x32xf32>
    %17 = tpu.matmul %11, %16, %cst_15 {dimension_numbers = #tpu.dot_dimension_numbers<[1], [0], [0], [1], [0, 0, 1, 1], [], []>} : vector<16x24xbf16>, vector<24x32xbf16>, vector<16x32xf32> -> vector<16x32xf32>
    %cst_16 = arith.constant 0.353553385 : f32
    %18 = vector.broadcast %cst_16 : f32 to vector<16x16xf32>
    %19 = arith.mulf %13, %18 : vector<16x16xf32>
    %20 = vector.shape_cast %19 : vector<16x16xf32> to vector<2x8x16xf32>
    %21 = arith.truncf %20 : vector<2x8x16xf32> to vector<2x8x16xbf16>
    %22 = vector.shape_cast %15 : vector<16x16xf32> to vector<2x8x16xf32>
    %23 = arith.truncf %22 : vector<2x8x16xf32> to vector<2x8x16xbf16>
    %24 = vector.shape_cast %17 : vector<16x32xf32> to vector<2x8x32xf32>
    %25 = arith.truncf %24 : vector<2x8x32xf32> to vector<2x8x32xbf16>
    %26 = vector.extract_strided_slice %21 {offsets = [0, 0, 0], sizes = [2, 8, 8], strides = [1, 1, 1]} : vector<2x8x16xbf16> to vector<2x8x8xbf16>
    %27 = vector.extract_strided_slice %23 {offsets = [0, 0, 0], sizes = [2, 8, 8], strides = [1, 1, 1]} : vector<2x8x16xbf16> to vector<2x8x8xbf16>
    %28 = vector.extract_strided_slice %25 {offsets = [0, 0, 0], sizes = [2, 8, 16], strides = [1, 1, 1]} : vector<2x8x32xbf16> to vector<2x8x16xbf16>
    "tpu.trace_start"() <{level = 10 : i32, message = "bqd,bkd->bqk"}> : () -> ()
    %cst_17 = arith.constant dense<0.000000e+00> : vector<2x8x8xf32>
    %29 = tpu.matmul %26, %27, %cst_17 {dimension_numbers = #tpu.dot_dimension_numbers<[2], [2], [1], [1], [0, 0, 0, 1, 1, 1], [0], [0]>} : vector<2x8x8xbf16>, vector<2x8x8xbf16>, vector<2x8x8xf32> -> vector<2x8x8xf32>
    "tpu.trace_stop"() : () -> ()
    %cst_18 = arith.constant dense<0xFF800000> : vector<2x8xf32>
    %30 = vector.multi_reduction <maximumf>, %29, %cst_18 [2] : vector<2x8x8xf32> to vector<2x8xf32>
    %31 = vector.shape_cast %30 : vector<2x8xf32> to vector<2x8x1xf32>
    %32 = vector.broadcast %31 : vector<2x8x1xf32> to vector<2x8x8xf32>
    %33 = arith.subf %29, %32 : vector<2x8x8xf32>
    %34 = math.exp %33 : vector<2x8x8xf32>
    %cst_19 = arith.constant dense<0.000000e+00> : vector<2x8xf32>
    %35 = vector.multi_reduction <add>, %34, %cst_19 [2] : vector<2x8x8xf32> to vector<2x8xf32>
    %36 = vector.shape_cast %35 : vector<2x8xf32> to vector<2x8x1xf32>
    %37 = tpu.reciprocal %36 : vector<2x8x1xf32> -> vector<2x8x1xf32>
    %38 = vector.broadcast %37 : vector<2x8x1xf32> to vector<2x8x8xf32>
    %39 = arith.mulf %34, %38 : vector<2x8x8xf32>
    %c0_20 = arith.constant 0 : index
    %c0_21 = arith.constant 0 : index
    %c0_22 = arith.constant 0 : index
    %c0_23 = arith.constant 0 : index
    %40 = vector.load %arg14[%c0_20, %c0_21, %c0_22, %c0_23] : memref<2x2x8x8xf32, #tpu.memory_space<vmem>>, vector<2x1x8x8xf32>
    %41 = vector.shape_cast %40 : vector<2x1x8x8xf32> to vector<2x8x8xf32>
    %42 = vector.shape_cast %39 : vector<2x8x8xf32> to vector<2x1x8x8xf32>
    tpu.vector_store %arg14[%c0_20, %c0_21, %c0_22, %c0_23], %42 {strides = array<i32>} : memref<2x2x8x8xf32, #tpu.memory_space<vmem>>, vector<2x1x8x8xf32>,
    %43 = arith.truncf %39 : vector<2x8x8xf32> to vector<2x8x8xbf16>
    "tpu.trace_start"() <{level = 10 : i32, message = "bqk,bkd->bqd"}> : () -> ()
    %cst_24 = arith.constant dense<0.000000e+00> : vector<2x8x16xf32>
    %44 = tpu.matmul %43, %28, %cst_24 {dimension_numbers = #tpu.dot_dimension_numbers<[2], [1], [1], [2], [0, 0, 0, 1, 1, 2], [0], [0]>} : vector<2x8x8xbf16>, vector<2x8x16xbf16>, vector<2x8x16xf32> -> vector<2x8x16xf32>
    "tpu.trace_stop"() : () -> ()
    %45 = vector.shape_cast %44 : vector<2x8x16xf32> to vector<16x16xf32>
    %c0_25 = arith.constant 0 : index
    %c0_26 = arith.constant 0 : index
    %46 = vector.load %arg15[%c0_25, %c0_26] : memref<16x32xf32, #tpu.memory_space<vmem>>, vector<16x16xf32>
    tpu.vector_store %arg15[%c0_25, %c0_26], %45 {strides = array<i32>} : memref<16x32xf32, #tpu.memory_space<vmem>>, vector<16x16xf32>,
    %47 = vector.extract_strided_slice %21 {offsets = [0, 0, 8], sizes = [2, 8, 8], strides = [1, 1, 1]} : vector<2x8x16xbf16> to vector<2x8x8xbf16>
    %48 = vector.extract_strided_slice %23 {offsets = [0, 0, 8], sizes = [2, 8, 8], strides = [1, 1, 1]} : vector<2x8x16xbf16> to vector<2x8x8xbf16>
    %49 = vector.extract_strided_slice %25 {offsets = [0, 0, 16], sizes = [2, 8, 16], strides = [1, 1, 1]} : vector<2x8x32xbf16> to vector<2x8x16xbf16>
    "tpu.trace_start"() <{level = 10 : i32, message = "bqd,bkd->bqk"}> : () -> ()
    %cst_27 = arith.constant dense<0.000000e+00> : vector<2x8x8xf32>
    %50 = tpu.matmul %47, %48, %cst_27 {dimension_numbers = #tpu.dot_dimension_numbers<[2], [2], [1], [1], [0, 0, 0, 1, 1, 1], [0], [0]>} : vector<2x8x8xbf16>, vector<2x8x8xbf16>, vector<2x8x8xf32> -> vector<2x8x8xf32>
    "tpu.trace_stop"() : () -> ()
    %cst_28 = arith.constant dense<0xFF800000> : vector<2x8xf32>
    %51 = vector.multi_reduction <maximumf>, %50, %cst_28 [2] : vector<2x8x8xf32> to vector<2x8xf32>
    %52 = vector.shape_cast %51 : vector<2x8xf32> to vector<2x8x1xf32>
    %53 = vector.broadcast %52 : vector<2x8x1xf32> to vector<2x8x8xf32>
    %54 = arith.subf %50, %53 : vector<2x8x8xf32>
    %55 = math.exp %54 : vector<2x8x8xf32>
    %cst_29 = arith.constant dense<0.000000e+00> : vector<2x8xf32>
    %56 = vector.multi_reduction <add>, %55, %cst_29 [2] : vector<2x8x8xf32> to vector<2x8xf32>
    %57 = vector.shape_cast %56 : vector<2x8xf32> to vector<2x8x1xf32>
    %58 = tpu.reciprocal %57 : vector<2x8x1xf32> -> vector<2x8x1xf32>
    %59 = vector.broadcast %58 : vector<2x8x1xf32> to vector<2x8x8xf32>
    %60 = arith.mulf %55, %59 : vector<2x8x8xf32>
    %c0_30 = arith.constant 0 : index
    %c1 = arith.constant 1 : index
    %c0_31 = arith.constant 0 : index
    %c0_32 = arith.constant 0 : index
    %61 = vector.load %arg14[%c0_30, %c1, %c0_31, %c0_32] : memref<2x2x8x8xf32, #tpu.memory_space<vmem>>, vector<2x1x8x8xf32>
    %62 = vector.shape_cast %61 : vector<2x1x8x8xf32> to vector<2x8x8xf32>
    %63 = vector.shape_cast %60 : vector<2x8x8xf32> to vector<2x1x8x8xf32>
    tpu.vector_store %arg14[%c0_30, %c1, %c0_31, %c0_32], %63 {strides = array<i32>} : memref<2x2x8x8xf32, #tpu.memory_space<vmem>>, vector<2x1x8x8xf32>,
    %64 = arith.truncf %60 : vector<2x8x8xf32> to vector<2x8x8xbf16>
    "tpu.trace_start"() <{level = 10 : i32, message = "bqk,bkd->bqd"}> : () -> ()
    %cst_33 = arith.constant dense<0.000000e+00> : vector<2x8x16xf32>
    %65 = tpu.matmul %64, %49, %cst_33 {dimension_numbers = #tpu.dot_dimension_numbers<[2], [1], [1], [2], [0, 0, 0, 1, 1, 2], [0], [0]>} : vector<2x8x8xbf16>, vector<2x8x16xbf16>, vector<2x8x16xf32> -> vector<2x8x16xf32>
    "tpu.trace_stop"() : () -> ()
    %66 = vector.shape_cast %65 : vector<2x8x16xf32> to vector<16x16xf32>
    %c0_34 = arith.constant 0 : index
    %c16 = arith.constant 16 : index
    %67 = vector.load %arg15[%c0_34, %c16] : memref<16x32xf32, #tpu.memory_space<vmem>>, vector<16x16xf32>
    tpu.vector_store %arg15[%c0_34, %c16], %66 {strides = array<i32>} : memref<16x32xf32, #tpu.memory_space<vmem>>, vector<16x16xf32>,
    %c0_35 = arith.constant 0 : index
    %c0_36 = arith.constant 0 : index
    %68 = vector.load %arg15[%c0_35, %c0_36] : memref<16x32xf32, #tpu.memory_space<vmem>>, vector<16x32xf32>
    %69 = arith.addf %2, %68 : vector<16x32xf32>
    %cst_37 = arith.constant dense<0.000000e+00> : vector<16xf32>
    %70 = vector.multi_reduction <add>, %69, %cst_37 [1] : vector<16x32xf32> to vector<16xf32>
    %71 = vector.shape_cast %70 : vector<16xf32> to vector<16x1xf32>
    %cst_38 = arith.constant 3.200000e+01 : f32
    %72 = vector.broadcast %cst_38 : f32 to vector<16x1xf32>
    %73 = arith.divf %71, %72 : vector<16x1xf32>
    %74 = vector.broadcast %73 : vector<16x1xf32> to vector<16x32xf32>
    %75 = arith.subf %69, %74 : vector<16x32xf32>
    %76 = arith.mulf %75, %75 : vector<16x32xf32>
    %cst_39 = arith.constant dense<0.000000e+00> : vector<16xf32>
    %77 = vector.multi_reduction <add>, %76, %cst_39 [1] : vector<16x32xf32> to vector<16xf32>
    %78 = vector.shape_cast %77 : vector<16xf32> to vector<16x1xf32>
    %cst_40 = arith.constant 3.200000e+01 : f32
    %79 = vector.broadcast %cst_40 : f32 to vector<16x1xf32>
    %80 = arith.divf %78, %79 : vector<16x1xf32>
    %81 = vector.broadcast %73 : vector<16x1xf32> to vector<16x32xf32>
    %82 = arith.subf %69, %81 : vector<16x32xf32>
    %cst_41 = arith.constant 9.99999997E-7 : f32
    %83 = vector.broadcast %cst_41 : f32 to vector<16x1xf32>
    %84 = arith.addf %80, %83 : vector<16x1xf32>
    %85 = math.rsqrt %84 : vector<16x1xf32>
    %86 = vector.broadcast %85 : vector<16x1xf32> to vector<16x32xf32>
    %87 = arith.mulf %82, %86 : vector<16x32xf32>
    %c0_42 = arith.constant 0 : index
    %c0_43 = arith.constant 0 : index
    %88 = vector.load %arg9[%c0_42, %c0_43] : memref<1x32xf32, #tpu.memory_space<vmem>>, vector<1x32xf32>
    %89 = vector.broadcast %88 : vector<1x32xf32> to vector<16x32xf32>
    %90 = arith.mulf %87, %89 : vector<16x32xf32>
    %c0_44 = arith.constant 0 : index
    %c0_45 = arith.constant 0 : index
    %91 = vector.load %arg10[%c0_44, %c0_45] : memref<1x32xf32, #tpu.memory_space<vmem>>, vector<1x32xf32>
    %92 = vector.broadcast %91 : vector<1x32xf32> to vector<16x32xf32>
    %93 = arith.addf %90, %92 : vector<16x32xf32>
    %94 = arith.truncf %93 : vector<16x32xf32> to vector<16x32xbf16>
    %c0_46 = arith.constant 0 : index
    %c0_47 = arith.constant 0 : index
    %95 = vector.load %arg8[%c0_46, %c0_47] : memref<32x32xbf16, #tpu.memory_space<vmem>>, vector<32x32xbf16>
    %cst_48 = arith.constant dense<0.000000e+00> : vector<16x32xf32>
    %96 = tpu.matmul %94, %95, %cst_48 {dimension_numbers = #tpu.dot_dimension_numbers<[1], [0], [0], [1], [0, 0, 1, 1], [], []>} : vector<16x32xbf16>, vector<32x32xbf16>, vector<16x32xf32> -> vector<16x32xf32>
    %97 = arith.addf %93, %96 : vector<16x32xf32>
    %cst_49 = arith.constant dense<0.000000e+00> : vector<16xf32>
    %98 = vector.multi_reduction <add>, %97, %cst_49 [1] : vector<16x32xf32> to vector<16xf32>
    %99 = vector.shape_cast %98 : vector<16xf32> to vector<16x1xf32>
    %cst_50 = arith.constant 3.200000e+01 : f32
    %100 = vector.broadcast %cst_50 : f32 to vector<16x1xf32>
    %101 = arith.divf %99, %100 : vector<16x1xf32>
    %102 = vector.broadcast %101 : vector<16x1xf32> to vector<16x32xf32>
    %103 = arith.subf %97, %102 : vector<16x32xf32>
    %104 = arith.mulf %103, %103 : vector<16x32xf32>
    %cst_51 = arith.constant dense<0.000000e+00> : vector<16xf32>
    %105 = vector.multi_reduction <add>, %104, %cst_51 [1] : vector<16x32xf32> to vector<16xf32>
    %106 = vector.shape_cast %105 : vector<16xf32> to vector<16x1xf32>
    %cst_52 = arith.constant 3.200000e+01 : f32
    %107 = vector.broadcast %cst_52 : f32 to vector<16x1xf32>
    %108 = arith.divf %106, %107 : vector<16x1xf32>
    %109 = vector.broadcast %101 : vector<16x1xf32> to vector<16x32xf32>
    %110 = arith.subf %97, %109 : vector<16x32xf32>
    %cst_53 = arith.constant 9.99999997E-7 : f32
    %111 = vector.broadcast %cst_53 : f32 to vector<16x1xf32>
    %112 = arith.addf %108, %111 : vector<16x1xf32>
    %113 = math.rsqrt %112 : vector<16x1xf32>
    %114 = vector.broadcast %113 : vector<16x1xf32> to vector<16x32xf32>
    %115 = arith.mulf %110, %114 : vector<16x32xf32>
    %c0_54 = arith.constant 0 : index
    %c0_55 = arith.constant 0 : index
    %116 = vector.load %arg11[%c0_54, %c0_55] : memref<1x32xf32, #tpu.memory_space<vmem>>, vector<1x32xf32>
    %117 = vector.broadcast %116 : vector<1x32xf32> to vector<16x32xf32>
    %118 = arith.mulf %115, %117 : vector<16x32xf32>
    %c0_56 = arith.constant 0 : index
    %c0_57 = arith.constant 0 : index
    %119 = vector.load %arg12[%c0_56, %c0_57] : memref<1x32xf32, #tpu.memory_space<vmem>>, vector<1x32xf32>
    %120 = vector.broadcast %119 : vector<1x32xf32> to vector<16x32xf32>
    %121 = arith.addf %118, %120 : vector<16x32xf32>
    %122 = vector.shape_cast %121 : vector<16x32xf32> to vector<2x8x32xf32>
    %c0_58 = arith.constant 0 : index
    %c0_59 = arith.constant 0 : index
    %c0_60 = arith.constant 0 : index
    %123 = vector.load %arg13[%c0_58, %c0_59, %c0_60] : memref<2x8x32xf32, #tpu.memory_space<vmem>>, vector<2x8x32xf32>
    tpu.vector_store %arg13[%c0_58, %c0_59, %c0_60], %122 {strides = array<i32>} : memref<2x8x32xf32, #tpu.memory_space<vmem>>, vector<2x8x32xf32>,
    return
  }
  func.func @transform_0(%arg0: i32, %arg1: i32) -> (i32, i32, i32) {
    %c0_i32 = arith.constant 0 : i32
    %c0_i32_0 = arith.constant 0 : i32
    return %arg0, %arg1, %c0_i32 : i32, i32, i32
  }
  func.func @transform_1(%arg0: i32, %arg1: i32) -> (i32, i32, i32) {
    %c0_i32 = arith.constant 0 : i32
    %c0_i32_0 = arith.constant 0 : i32
    %c0_i32_1 = arith.constant 0 : i32
    return %arg0, %c0_i32, %c0_i32_0 : i32, i32, i32
  }
  func.func @transform_2(%arg0: i32, %arg1: i32) -> (i32, i32, i32) {
    %c0_i32 = arith.constant 0 : i32
    %c0_i32_0 = arith.constant 0 : i32
    %c0_i32_1 = arith.constant 0 : i32
    return %arg0, %c0_i32, %c0_i32_0 : i32, i32, i32
  }
  func.func @transform_3(%arg0: i32, %arg1: i32) -> (i32, i32) {
    %c0_i32 = arith.constant 0 : i32
    %c0_i32_0 = arith.constant 0 : i32
    %c0_i32_1 = arith.constant 0 : i32
    return %c0_i32, %c0_i32_0 : i32, i32
  }
  func.func @transform_4(%arg0: i32, %arg1: i32) -> (i32, i32) {
    %c0_i32 = arith.constant 0 : i32
    %c0_i32_0 = arith.constant 0 : i32
    %c0_i32_1 = arith.constant 0 : i32
    return %c0_i32, %c0_i32_0 : i32, i32
  }
  func.func @transform_5(%arg0: i32, %arg1: i32) -> (i32, i32) {
    %c0_i32 = arith.constant 0 : i32
    %c0_i32_0 = arith.constant 0 : i32
    %c0_i32_1 = arith.constant 0 : i32
    return %c0_i32, %c0_i32_0 : i32, i32
  }
  func.func @transform_6(%arg0: i32, %arg1: i32) -> (i32, i32) {
    %c0_i32 = arith.constant 0 : i32
    %c0_i32_0 = arith.constant 0 : i32
    %c0_i32_1 = arith.constant 0 : i32
    return %c0_i32, %c0_i32_0 : i32, i32
  }
  func.func @transform_7(%arg0: i32, %arg1: i32) -> (i32, i32) {
    %c0_i32 = arith.constant 0 : i32
    %c0_i32_0 = arith.constant 0 : i32
    %c0_i32_1 = arith.constant 0 : i32
    return %c0_i32, %c0_i32_0 : i32, i32
  }
  func.func @transform_8(%arg0: i32, %arg1: i32) -> (i32, i32) {
    %c0_i32 = arith.constant 0 : i32
    %c0_i32_0 = arith.constant 0 : i32
    %c0_i32_1 = arith.constant 0 : i32
    return %c0_i32, %c0_i32_0 : i32, i32
  }
  func.func @transform_9(%arg0: i32, %arg1: i32) -> (i32, i32) {
    %c0_i32 = arith.constant 0 : i32
    %c0_i32_0 = arith.constant 0 : i32
    %c0_i32_1 = arith.constant 0 : i32
    return %c0_i32, %c0_i32_0 : i32, i32
  }
  func.func @transform_10(%arg0: i32, %arg1: i32) -> (i32, i32) {
    %c0_i32 = arith.constant 0 : i32
    %c0_i32_0 = arith.constant 0 : i32
    %c0_i32_1 = arith.constant 0 : i32
    return %c0_i32, %c0_i32_0 : i32, i32
  }
  func.func @transform_11(%arg0: i32, %arg1: i32) -> (i32, i32, i32) {
    %c0_i32 = arith.constant 0 : i32
    %c0_i32_0 = arith.constant 0 : i32
    return %arg0, %arg1, %c0_i32 : i32, i32, i32
  }
  func.func @transform_12(%arg0: i32, %arg1: i32) -> (i32, i32, i32, i32) {
    %c0_i32 = arith.constant 0 : i32
    %c0_i32_0 = arith.constant 0 : i32
    %c0_i32_1 = arith.constant 0 : i32
    return %arg0, %c0_i32, %arg1, %c0_i32_0 : i32, i32, i32, i32
  }
}

</mosaic_0001>

<llo_original>
// kernel: tpu_custom_call.1
$region0: #{tpu_custom_call.1}
  #allocation0 [shape = 'u32[]', space=smem, size = 0x4, offset = 0x4, fixed_abs, tag = 'smem constant byte address 0x4 - core index']
  #allocation1 [shape = 'u32[144,128]{1,0:T(1,128)}', space=vmem, size = 0x12000, scoped, tag = 'internal scratch']
  #allocation2 [shape = 'f32[16,32]{1,0:T(8,128)}', space=vmem, size = 0x2000, scoped, tag = 'scratch operand']
  %s0 = inlined_call_operand.vmem [shape: bf16[4,8,32], index: 0, kind: input, shape index: {}]
  %s1 = inlined_call_operand.vmem [shape: bf16[4,8,24], index: 1, kind: input, shape index: {}]
  %s2 = inlined_call_operand.vmem [shape: bf16[4,8,24], index: 2, kind: input, shape index: {}]
  %s3 = inlined_call_operand.vmem [shape: bf16[32,16], index: 3, kind: input, shape index: {}]
  %s4 = inlined_call_operand.vmem [shape: bf16[24,16], index: 4, kind: input, shape index: {}]
  %s5 = inlined_call_operand.hbm [shape: bf16[24,32], index: 5, kind: input, shape index: {}]
  %s6 = inlined_call_operand.vmem [shape: bf16[32,32], index: 6, kind: input, shape index: {}]
  %s7 = inlined_call_operand.vmem [shape: f32[1,32], index: 7, kind: input, shape index: {}]
  %s8 = inlined_call_operand.vmem [shape: f32[1,32], index: 8, kind: input, shape index: {}]
  %s9 = inlined_call_operand.vmem [shape: f32[1,32], index: 9, kind: input, shape index: {}]
  %s10 = inlined_call_operand.vmem [shape: f32[1,32], index: 10, kind: input, shape index: {}]
  %s11 = inlined_call_operand.hbm [shape: f32[4,8,32], index: 11, kind: output, shape index: {0}]
  %s12 = inlined_call_operand.hbm [shape: f32[4,2,8,8], index: 12, kind: output, shape index: {1}]
  %13 = xla_tuple %s11, %s12
  %s14 = sld [smem:[#allocation0]]
  $region89: #{tpu_custom_call.1} parent=0
    _
  %s16 = ssub.s32 1, %s14
  %s17 = scalar_select 0, %s16, %s14
  $region1: #{tpu_custom_call.1} parent=0
    #allocation3 [shape = 'u8[6144]{0}', space=vmem, size = 0x1800, scoped, tag = 'input window, operand 5, single buffered']
    #allocation4 [shape = 's32[2]{0}', space=sflag, size = 0x8, scoped, tag = 'scoped memory for tpu_custom_call.1']
    #allocation5 [shape = 's32[2]{0}', space=sflag, size = 0x8, scoped, tag = 'scoped memory for tpu_custom_call.1']
    #allocation6 [shape = 'u8[16384]{0}', space=vmem, size = 0x4000, scoped, tag = 'output window, operand 0']
    #allocation7 [shape = 'u8[32768]{0}', space=vmem, size = 0x8000, scoped, tag = 'output window, operand 1']
    #allocation8 [shape = 's32[2]{0}', space=sflag, size = 0x8, scoped, tag = 'scoped memory for tpu_custom_call.1']
    %18 = vsyncpa [#allocation4], 0
    %19 = vsyncpa [#allocation5], 0
    %s20 = scalar_lea.sflag [#allocation5], 1
    %21 = vsyncpa %s20, 0
    %22 = vsyncpa [#allocation8], 0
    %s23 = scalar_lea.sflag [#allocation8], 1
    %24 = vsyncpa %s23, 0
    loop: start=0, step=1, limit=4
    $region2: #{tpu_custom_call.1} parent=1 // loop_pre_header
      _
    $region3: #{tpu_custom_call.1} parent=1 // loop_header
      %s26 = sphi 0, %s30
      %p27 = scmp.ge.s32.totalorder %s26, 4
      %s33 = sphi 0, %s45
      %s34 = sphi 0, %s41
      %s35 = sphi 0, %s33
      %s36 = sphi 0, %s34
      %s37 = sphi 0, %s35
      %s38 = sphi 0, %s36
      %s50 = sphi 0, %s52
      %s53 = sphi 0, %s50
      %s54 = sphi 0, %s53
      %s70 = sphi 0, %s54
      %s76 = sphi 0, %s78
      %s79 = sphi 0, %s76
      %s80 = sphi 0, %s79
      %s96 = sphi 0, %s80
      %s102 = sphi 0, %s104
      %s105 = sphi 0, %s102
      %s106 = sphi 0, %s105
      %s122 = sphi 0, %s106
      %s126 = sphi 0, %s126
      %s128 = sphi 0, %s126
      %s129 = sphi 0, %s128
      %s143 = sphi 0, %s129
      %s147 = sphi 0, %s147
      %s149 = sphi 0, %s147
      %s150 = sphi 0, %s149
      %s164 = sphi 0, %s150
      %s168 = sphi 0, %s168
      %s170 = sphi 0, %s168
      %s171 = sphi 0, %s170
      %s185 = sphi 0, %s171
      %s189 = sphi 0, %s189
      %s191 = sphi 0, %s189
      %s192 = sphi 0, %s191
      %s206 = sphi 0, %s192
      %s210 = sphi 0, %s210
      %s212 = sphi 0, %s210
      %s213 = sphi 0, %s212
      %s227 = sphi 0, %s213
      %s231 = sphi 0, %s231
      %s233 = sphi 0, %s231
      %s234 = sphi 0, %s233
      %s248 = sphi 0, %s234
      %s252 = sphi 0, %s252
      %s254 = sphi 0, %s252
      %s255 = sphi 0, %s254
      %s269 = sphi 0, %s255
      %s273 = sphi 0, %s273
      %s275 = sphi 0, %s273
      %s276 = sphi 0, %s275
      %s290 = sphi 0, %s276
      %s298 = sphi 0, %s300
      %s301 = sphi 0, %s298
      %s302 = sphi 0, %s301
      %s318 = sphi 0, %s302
      %s326 = sphi 0, %s328
      %s329 = sphi 0, %s326
      %s330 = sphi 0, %s329
      %s346 = sphi 0, %s330
    $region4: #{tpu_custom_call.1} parent=1 // loop_header_branch
      %29 = sbr.rel (%p27) target = $region8
    $region5: #{tpu_custom_call.1} parent=1 // loop_body
      %s31 = ssub.s32 %s26, 1
      %s32 = ssub.s32 %s26, 2
      %s39 = sadd.s32 1, %s34
      %p40 = scmp.ge.s32.totalorder %s39, 1
      %s41 = scalar_select %p40, 0, %s39
      %s42 = sadd.s32 1, %s33
      %s43 = scalar_select %p40, %s42, %s33
      %p44 = scmp.ge.s32.totalorder %s43, 2
      %s45 = scalar_select %p44, 0, %s43
      %s46 = ssub.s32 %s33, %s45
      %s47 = ssub.s32 %s34, %s41
      %s48 = sor.u32 %s46, %s47
      %p49 = scmp.eq.s32.totalorder %s48, 0
      %s51 = sadd.s32 %s50, 1
      %s52 = scalar_select %p49, %s50, %s51
      %p55 = pneg %p49
      %p56 = scmp.eq.s32.totalorder %s26, 1
      %p57 = por %p55, %p56
      %p58 = scmp.ne.s32.totalorder %s50, %s53
      %p59 = scmp.eq.s32.totalorder %s26, 0
      %p60 = por %p58, %p59
      %p61 = scmp.ne.s32.totalorder %s50, %s53
      %p62 = scmp.eq.s32.totalorder %s31, 1
      %p63 = por %p61, %p62
      %p64 = scmp.ne.s32.totalorder %s53, %s54
      %p65 = scmp.eq.s32.totalorder %s31, 0
      %p66 = por %p64, %p65
      %p67 = scmp.ne.s32.totalorder %s53, %s54
      %p68 = scmp.eq.s32.totalorder %s32, 1
      %p69 = por %p67, %p68
      %p71 = scmp.ne.s32.totalorder %s54, %s70
      %p72 = scmp.eq.s32.totalorder %s32, 0
      %p73 = por %p71, %p72
      %s74 = ssub.s32 %s33, %s45
      %p75 = scmp.eq.s32.totalorder %s74, 0
      %s77 = sadd.s32 %s76, 1
      %s78 = scalar_select %p75, %s76, %s77
      %p81 = pneg %p75
      %p82 = scmp.eq.s32.totalorder %s26, 1
      %p83 = por %p81, %p82
      %p84 = scmp.ne.s32.totalorder %s76, %s79
      %p85 = scmp.eq.s32.totalorder %s26, 0
      %p86 = por %p84, %p85
      %p87 = scmp.ne.s32.totalorder %s76, %s79
      %p88 = scmp.eq.s32.totalorder %s31, 1
      %p89 = por %p87, %p88
      %p90 = scmp.ne.s32.totalorder %s79, %s80
      %p91 = scmp.eq.s32.totalorder %s31, 0
      %p92 = por %p90, %p91
      %p93 = scmp.ne.s32.totalorder %s79, %s80
      %p94 = scmp.eq.s32.totalorder %s32, 1
      %p95 = por %p93, %p94
      %p97 = scmp.ne.s32.totalorder %s80, %s96
      %p98 = scmp.eq.s32.totalorder %s32, 0
      %p99 = por %p97, %p98
      %s100 = ssub.s32 %s33, %s45
      %p101 = scmp.eq.s32.totalorder %s100, 0
      %s103 = sadd.s32 %s102, 1
      %s104 = scalar_select %p101, %s102, %s103
      %p107 = pneg %p101
      %p108 = scmp.eq.s32.totalorder %s26, 1
      %p109 = por %p107, %p108
      %p110 = scmp.ne.s32.totalorder %s102, %s105
      %p111 = scmp.eq.s32.totalorder %s26, 0
      %p112 = por %p110, %p111
      %p113 = scmp.ne.s32.totalorder %s102, %s105
      %p114 = scmp.eq.s32.totalorder %s31, 1
      %p115 = por %p113, %p114
      %p116 = scmp.ne.s32.totalorder %s105, %s106
      %p117 = scmp.eq.s32.totalorder %s31, 0
      %p118 = por %p116, %p117
      %p119 = scmp.ne.s32.totalorder %s105, %s106
      %p120 = scmp.eq.s32.totalorder %s32, 1
      %p121 = por %p119, %p120
      %p123 = scmp.ne.s32.totalorder %s106, %s122
      %p124 = scmp.eq.s32.totalorder %s32, 0
      %p125 = por %p123, %p124
      %s127 = sadd.s32 %s126, 1
      %p130 = scmp.eq.s32.totalorder %s26, 1
      %p131 = scmp.ne.s32.totalorder %s126, %s128
      %p132 = scmp.eq.s32.totalorder %s26, 0
      %p133 = por %p131, %p132
      %p134 = scmp.ne.s32.totalorder %s126, %s128
      %p135 = scmp.eq.s32.totalorder %s31, 1
      %p136 = por %p134, %p135
      %p137 = scmp.ne.s32.totalorder %s128, %s129
      %p138 = scmp.eq.s32.totalorder %s31, 0
      %p139 = por %p137, %p138
      %p140 = scmp.ne.s32.totalorder %s128, %s129
      %p141 = scmp.eq.s32.totalorder %s32, 1
      %p142 = por %p140, %p141
      %p144 = scmp.ne.s32.totalorder %s129, %s143
      %p145 = scmp.eq.s32.totalorder %s32, 0
      %p146 = por %p144, %p145
      %s148 = sadd.s32 %s147, 1
      %p151 = scmp.eq.s32.totalorder %s26, 1
      %p152 = scmp.ne.s32.totalorder %s147, %s149
      %p153 = scmp.eq.s32.totalorder %s26, 0
      %p154 = por %p152, %p153
      %p155 = scmp.ne.s32.totalorder %s147, %s149
      %p156 = scmp.eq.s32.totalorder %s31, 1
      %p157 = por %p155, %p156
      %p158 = scmp.ne.s32.totalorder %s149, %s150
      %p159 = scmp.eq.s32.totalorder %s31, 0
      %p160 = por %p158, %p159
      %p161 = scmp.ne.s32.totalorder %s149, %s150
      %p162 = scmp.eq.s32.totalorder %s32, 1
      %p163 = por %p161, %p162
      %p165 = scmp.ne.s32.totalorder %s150, %s164
      %p166 = scmp.eq.s32.totalorder %s32, 0
      %p167 = por %p165, %p166
      %s169 = sadd.s32 %s168, 1
      %p172 = scmp.eq.s32.totalorder %s26, 1
      %p173 = scmp.ne.s32.totalorder %s168, %s170
      %p174 = scmp.eq.s32.totalorder %s26, 0
      %p175 = por %p173, %p174
      %p176 = scmp.ne.s32.totalorder %s168, %s170
      %p177 = scmp.eq.s32.totalorder %s31, 1
      %p178 = por %p176, %p177
      %p179 = scmp.ne.s32.totalorder %s170, %s171
      %p180 = scmp.eq.s32.totalorder %s31, 0
      %p181 = por %p179, %p180
      %p182 = scmp.ne.s32.totalorder %s170, %s171
      %p183 = scmp.eq.s32.totalorder %s32, 1
      %p184 = por %p182, %p183
      %p186 = scmp.ne.s32.totalorder %s171, %s185
      %p187 = scmp.eq.s32.totalorder %s32, 0
      %p188 = por %p186, %p187
      %s190 = sadd.s32 %s189, 1
      %p193 = scmp.eq.s32.totalorder %s26, 1
      %p194 = scmp.ne.s32.totalorder %s189, %s191
      %p195 = scmp.eq.s32.totalorder %s26, 0
      %p196 = por %p194, %p195
      %p197 = scmp.ne.s32.totalorder %s189, %s191
      %p198 = scmp.eq.s32.totalorder %s31, 1
      %p199 = por %p197, %p198
      %p200 = scmp.ne.s32.totalorder %s191, %s192
      %p201 = scmp.eq.s32.totalorder %s31, 0
      %p202 = por %p200, %p201
      %p203 = scmp.ne.s32.totalorder %s191, %s192
      %p204 = scmp.eq.s32.totalorder %s32, 1
      %p205 = por %p203, %p204
      %p207 = scmp.ne.s32.totalorder %s192, %s206
      %p208 = scmp.eq.s32.totalorder %s32, 0
      %p209 = por %p207, %p208
      %s211 = sadd.s32 %s210, 1
      %p214 = scmp.eq.s32.totalorder %s26, 1
      %p215 = scmp.ne.s32.totalorder %s210, %s212
      %p216 = scmp.eq.s32.totalorder %s26, 0
      %p217 = por %p215, %p216
      %p218 = scmp.ne.s32.totalorder %s210, %s212
      %p219 = scmp.eq.s32.totalorder %s31, 1
      %p220 = por %p218, %p219
      %p221 = scmp.ne.s32.totalorder %s212, %s213
      %p222 = scmp.eq.s32.totalorder %s31, 0
      %p223 = por %p221, %p222
      %p224 = scmp.ne.s32.totalorder %s212, %s213
      %p225 = scmp.eq.s32.totalorder %s32, 1
      %p226 = por %p224, %p225
      %p228 = scmp.ne.s32.totalorder %s213, %s227
      %p229 = scmp.eq.s32.totalorder %s32, 0
      %p230 = por %p228, %p229
      %s232 = sadd.s32 %s231, 1
      %p235 = scmp.eq.s32.totalorder %s26, 1
      %p236 = scmp.ne.s32.totalorder %s231, %s233
      %p237 = scmp.eq.s32.totalorder %s26, 0
      %p238 = por %p236, %p237
      %p239 = scmp.ne.s32.totalorder %s231, %s233
      %p240 = scmp.eq.s32.totalorder %s31, 1
      %p241 = por %p239, %p240
      %p242 = scmp.ne.s32.totalorder %s233, %s234
      %p243 = scmp.eq.s32.totalorder %s31, 0
      %p244 = por %p242, %p243
      %p245 = scmp.ne.s32.totalorder %s233, %s234
      %p246 = scmp.eq.s32.totalorder %s32, 1
      %p247 = por %p245, %p246
      %p249 = scmp.ne.s32.totalorder %s234, %s248
      %p250 = scmp.eq.s32.totalorder %s32, 0
      %p251 = por %p249, %p250
      %s253 = sadd.s32 %s252, 1
      %p256 = scmp.eq.s32.totalorder %s26, 1
      %p257 = scmp.ne.s32.totalorder %s252, %s254
      %p258 = scmp.eq.s32.totalorder %s26, 0
      %p259 = por %p257, %p258
      %p260 = scmp.ne.s32.totalorder %s252, %s254
      %p261 = scmp.eq.s32.totalorder %s31, 1
      %p262 = por %p260, %p261
      %p263 = scmp.ne.s32.totalorder %s254, %s255
      %p264 = scmp.eq.s32.totalorder %s31, 0
      %p265 = por %p263, %p264
      %p266 = scmp.ne.s32.totalorder %s254, %s255
      %p267 = scmp.eq.s32.totalorder %s32, 1
      %p268 = por %p266, %p267
      %p270 = scmp.ne.s32.totalorder %s255, %s269
      %p271 = scmp.eq.s32.totalorder %s32, 0
      %p272 = por %p270, %p271
      %s274 = sadd.s32 %s273, 1
      %p277 = scmp.eq.s32.totalorder %s26, 1
      %p278 = scmp.ne.s32.totalorder %s273, %s275
      %p279 = scmp.eq.s32.totalorder %s26, 0
      %p280 = por %p278, %p279
      %p281 = scmp.ne.s32.totalorder %s273, %s275
      %p282 = scmp.eq.s32.totalorder %s31, 1
      %p283 = por %p281, %p282
      %p284 = scmp.ne.s32.totalorder %s275, %s276
      %p285 = scmp.eq.s32.totalorder %s31, 0
      %p286 = por %p284, %p285
      %p287 = scmp.ne.s32.totalorder %s275, %s276
      %p288 = scmp.eq.s32.totalorder %s32, 1
      %p289 = por %p287, %p288
      %p291 = scmp.ne.s32.totalorder %s276, %s290
      %p292 = scmp.eq.s32.totalorder %s32, 0
      %p293 = por %p291, %p292
      %s294 = ssub.s32 %s33, %s45
      %s295 = ssub.s32 %s34, %s41
      %s296 = sor.u32 %s294, %s295
      %p297 = scmp.eq.s32.totalorder %s296, 0
      %s299 = sadd.s32 %s298, 1
      %s300 = scalar_select %p297, %s298, %s299
      %p303 = pneg %p297
      %p304 = scmp.eq.s32.totalorder %s26, 1
      %p305 = por %p303, %p304
      %p306 = scmp.ne.s32.totalorder %s298, %s301
      %p307 = scmp.eq.s32.totalorder %s26, 0
      %p308 = por %p306, %p307
      %p309 = scmp.ne.s32.totalorder %s298, %s301
      %p310 = scmp.eq.s32.totalorder %s31, 1
      %p311 = por %p309, %p310
      %p312 = scmp.ne.s32.totalorder %s301, %s302
      %p313 = scmp.eq.s32.totalorder %s31, 0
      %p314 = por %p312, %p313
      %p315 = scmp.ne.s32.totalorder %s301, %s302
      %p316 = scmp.eq.s32.totalorder %s32, 1
      %p317 = por %p315, %p316
      %p319 = scmp.ne.s32.totalorder %s302, %s318
      %p320 = scmp.eq.s32.totalorder %s32, 0
      %p321 = por %p319, %p320
      %s322 = ssub.s32 %s33, %s45
      %s323 = ssub.s32 %s34, %s41
      %s324 = sor.u32 %s322, %s323
      %p325 = scmp.eq.s32.totalorder %s324, 0
      %s327 = sadd.s32 %s326, 1
      %s328 = scalar_select %p325, %s326, %s327
      %p331 = pneg %p325
      %p332 = scmp.eq.s32.totalorder %s26, 1
      %p333 = por %p331, %p332
      %p334 = scmp.ne.s32.totalorder %s326, %s329
      %p335 = scmp.eq.s32.totalorder %s26, 0
      %p336 = por %p334, %p335
      %p337 = scmp.ne.s32.totalorder %s326, %s329
      %p338 = scmp.eq.s32.totalorder %s31, 1
      %p339 = por %p337, %p338
      %p340 = scmp.ne.s32.totalorder %s329, %s330
      %p341 = scmp.eq.s32.totalorder %s31, 0
      %p342 = por %p340, %p341
      %p343 = scmp.ne.s32.totalorder %s329, %s330
      %p344 = scmp.eq.s32.totalorder %s32, 1
      %p345 = por %p343, %p344
      %p347 = scmp.ne.s32.totalorder %s330, %s346
      %p348 = scmp.eq.s32.totalorder %s32, 0
      %p349 = por %p347, %p348
      %p350 = scmp.le.s32.totalorder 1, %s26
      %p351 = scmp.lt.s32.totalorder %s26, 3
      %p352 = pnand %p350, %p351
      %p353 = pneg %p352
      // Predicated region
      $region9: #{tpu_custom_call.1} parent=5 // pred_check
        _
      $region10: #{tpu_custom_call.1} parent=5 // pred_check_branch
        %355 = sbr.rel (%p352) target = $region12
      $region11: #{tpu_custom_call.1} parent=5 // pred_region
        %s356 = ssub.s32 %s26, 1
        // Predicated region
        $region13: #{tpu_custom_call.1} parent=11 // pred_check
          %p357 = pneg %p139
        $region14: #{tpu_custom_call.1} parent=11 // pred_check_branch
          %359 = sbr.rel (%p357) target = $region16
        $region15: #{tpu_custom_call.1} parent=11 // pred_region
          _
        $region16: #{tpu_custom_call.1} parent=11 // pred_fallthru
          _
        // Predicated region
        $region17: #{tpu_custom_call.1} parent=11 // pred_check
          %p360 = pneg %p160
        $region18: #{tpu_custom_call.1} parent=11 // pred_check_branch
          %362 = sbr.rel (%p360) target = $region20
        $region19: #{tpu_custom_call.1} parent=11 // pred_region
          _
        $region20: #{tpu_custom_call.1} parent=11 // pred_fallthru
          _
        // Predicated region
        $region21: #{tpu_custom_call.1} parent=11 // pred_check
          %p363 = pneg %p181
        $region22: #{tpu_custom_call.1} parent=11 // pred_check_branch
          %365 = sbr.rel (%p363) target = $region24
        $region23: #{tpu_custom_call.1} parent=11 // pred_region
          %s367 = ssub.s32 192, 192
          %368 = vsyncadd [#allocation4], %s367
          %s369 = sshll.u32 [#allocation3], 4
          %s370 = int_to_ptr.vmem [resolvable:$true] %s369
          %375 = dma.hbm_to_vmem [thread:$0]  %s5, 192, %s370, [#allocation4], 64, 64, 4
        $region24: #{tpu_custom_call.1} parent=11 // pred_fallthru
          _
        // Predicated region
        $region25: #{tpu_custom_call.1} parent=11 // pred_check
          %p376 = pneg %p202
        $region26: #{tpu_custom_call.1} parent=11 // pred_check_branch
          %378 = sbr.rel (%p376) target = $region28
        $region27: #{tpu_custom_call.1} parent=11 // pred_region
          _
        $region28: #{tpu_custom_call.1} parent=11 // pred_fallthru
          _
        // Predicated region
        $region29: #{tpu_custom_call.1} parent=11 // pred_check
          %p379 = pneg %p223
        $region30: #{tpu_custom_call.1} parent=11 // pred_check_branch
          %381 = sbr.rel (%p379) target = $region32
        $region31: #{tpu_custom_call.1} parent=11 // pred_region
          _
        $region32: #{tpu_custom_call.1} parent=11 // pred_fallthru
          _
        // Predicated region
        $region33: #{tpu_custom_call.1} parent=11 // pred_check
          %p382 = pneg %p244
        $region34: #{tpu_custom_call.1} parent=11 // pred_check_branch
          %384 = sbr.rel (%p382) target = $region36
        $region35: #{tpu_custom_call.1} parent=11 // pred_region
          _
        $region36: #{tpu_custom_call.1} parent=11 // pred_fallthru
          _
        // Predicated region
        $region37: #{tpu_custom_call.1} parent=11 // pred_check
          %p385 = pneg %p265
        $region38: #{tpu_custom_call.1} parent=11 // pred_check_branch
          %387 = sbr.rel (%p385) target = $region40
        $region39: #{tpu_custom_call.1} parent=11 // pred_region
          _
        $region40: #{tpu_custom_call.1} parent=11 // pred_fallthru
          _
        // Predicated region
        $region41: #{tpu_custom_call.1} parent=11 // pred_check
          %p388 = pneg %p286
        $region42: #{tpu_custom_call.1} parent=11 // pred_check_branch
          %390 = sbr.rel (%p388) target = $region44
        $region43: #{tpu_custom_call.1} parent=11 // pred_region
          _
        $region44: #{tpu_custom_call.1} parent=11 // pred_fallthru
          _
      $region12: #{tpu_custom_call.1} parent=5 // pred_fallthru
        _
      %p391 = scmp.lt.s32.totalorder %s26, 2
      // Predicated region
      $region45: #{tpu_custom_call.1} parent=5 // pred_check
        %p392 = pneg %p391
      $region46: #{tpu_custom_call.1} parent=5 // pred_check_branch
        %394 = sbr.rel (%p392) target = $region48
      $region47: #{tpu_custom_call.1} parent=5 // pred_region
        // Predicated region
        $region49: #{tpu_custom_call.1} parent=47 // pred_check
          %p395 = pneg %p60
        $region50: #{tpu_custom_call.1} parent=47 // pred_check_branch
          %397 = sbr.rel (%p395) target = $region52
        $region51: #{tpu_custom_call.1} parent=47 // pred_region
          %s398 = smul.u32 2, %s33
          %p399 = scmp.lt.s32.totalorder %s398, 3
          %s400 = scalar_select %p399, %s398, 3
          %p401 = scmp.lt.s32.totalorder %s34, 0
          %s402 = scalar_select %p401, %s34, 0
          %s403 = sadd.s32 %s402, %s400
          %s404 = smul.addr %s403, 4
          %s405 = scalar_lea.vmem %s0, %s404
          %s406 = smul.u32 2, %s33
        $region52: #{tpu_custom_call.1} parent=47 // pred_fallthru
          _
        // Predicated region
        $region53: #{tpu_custom_call.1} parent=47 // pred_check
          %p407 = pneg %p86
        $region54: #{tpu_custom_call.1} parent=47 // pred_check_branch
          %409 = sbr.rel (%p407) target = $region56
        $region55: #{tpu_custom_call.1} parent=47 // pred_region
          %s410 = smul.u32 2, %s33
          %p411 = scmp.lt.s32.totalorder %s410, 3
          %s412 = scalar_select %p411, %s410, 3
          %s413 = smul.addr %s412, 4
          %s414 = scalar_lea.vmem %s1, %s413
          %s415 = smul.u32 2, %s33
        $region56: #{tpu_custom_call.1} parent=47 // pred_fallthru
          _
        // Predicated region
        $region57: #{tpu_custom_call.1} parent=47 // pred_check
          %p416 = pneg %p112
        $region58: #{tpu_custom_call.1} parent=47 // pred_check_branch
          %418 = sbr.rel (%p416) target = $region60
        $region59: #{tpu_custom_call.1} parent=47 // pred_region
          %s419 = smul.u32 2, %s33
          %p420 = scmp.lt.s32.totalorder %s419, 3
          %s421 = scalar_select %p420, %s419, 3
          %s422 = smul.addr %s421, 4
          %s423 = scalar_lea.vmem %s2, %s422
          %s424 = smul.u32 2, %s33
        $region60: #{tpu_custom_call.1} parent=47 // pred_fallthru
          _
      $region48: #{tpu_custom_call.1} parent=5 // pred_fallthru
        _
      %p425 = scmp.le.s32.totalorder 1, %s26
      %p426 = scmp.lt.s32.totalorder %s26, 3
      %p427 = pnand %p425, %p426
      %p428 = pneg %p427
      // Predicated region
      $region61: #{tpu_custom_call.1} parent=5 // pred_check
        _
      $region62: #{tpu_custom_call.1} parent=5 // pred_check_branch
        %430 = sbr.rel (%p427) target = $region64
      $region63: #{tpu_custom_call.1} parent=5 // pred_region
        %s431 = ssub.s32 %s26, 1
        // Predicated region
        $region65: #{tpu_custom_call.1} parent=63 // pred_check
          %p432 = pneg %p181
        $region66: #{tpu_custom_call.1} parent=63 // pred_check_branch
          %434 = sbr.rel (%p432) target = $region68
        $region67: #{tpu_custom_call.1} parent=63 // pred_region
          %435 = dma.done [#allocation4], 192
        $region68: #{tpu_custom_call.1} parent=63 // pred_fallthru
          _
        %s436 = smul.u32 2, %s35
        %p437 = scmp.lt.s32.totalorder %s436, 3
        %s438 = scalar_select %p437, %s436, 3
        %p439 = scmp.lt.s32.totalorder %s36, 0
        %s440 = scalar_select %p439, %s36, 0
        %s441 = sadd.s32 %s440, %s438
        %s442 = smul.addr %s441, 4
        %s443 = scalar_lea.vmem %s0, %s442
        %p444 = pneg %p66
        %p445 = pneg %p63
        %s446 = smul.u32 2, %s35
        %p447 = scmp.lt.s32.totalorder %s446, 3
        %s448 = scalar_select %p447, %s446, 3
        %s449 = smul.addr %s448, 4
        %s450 = scalar_lea.vmem %s1, %s449
        %p451 = pneg %p92
        %p452 = pneg %p89
        %s453 = smul.u32 2, %s35
        %p454 = scmp.lt.s32.totalorder %s453, 3
        %s455 = scalar_select %p454, %s453, 3
        %s456 = smul.addr %s455, 4
        %s457 = scalar_lea.vmem %s2, %s456
        %p458 = pneg %p118
        %p459 = pneg %p115
        %p460 = pneg %p139
        %p461 = pneg %p136
        %p462 = pneg %p160
        %p463 = pneg %p157
        %p464 = pneg %p181
        %p465 = pneg %p178
        %p466 = pneg %p202
        %p467 = pneg %p199
        %p468 = pneg %p223
        %p469 = pneg %p220
        %p470 = pneg %p244
        %p471 = pneg %p241
        %p472 = pneg %p265
        %p473 = pneg %p262
        %p474 = pneg %p286
        %p475 = pneg %p283
        %p476 = pneg %p314
        %p477 = pneg %p311
        %s478 = sand.u32 %s301, 1
        %s479 = scalar_lea.sflag [#allocation5], %s478
        %s480 = sand.u32 %s301, 1
        %s481 = smul.addr %s480, 16
        %s482 = scalar_lea.vmem [#allocation6], %s481
        %p483 = pneg %p342
        %p484 = pneg %p339
        %s485 = sand.u32 %s329, 1
        %s486 = scalar_lea.sflag [#allocation8], %s485
        %s487 = sand.u32 %s329, 1
        %s488 = smul.addr %s487, 32
        %s489 = scalar_lea.vmem [#allocation7], %s488
        %s490 = smul.u32 2, %s35
        %p491 = scmp.lt.s32.totalorder %s490, 3
        %s492 = scalar_select %p491, %s490, 3
        %p493 = scmp.lt.s32.totalorder %s36, 0
        %s494 = scalar_select %p493, %s36, 0
        %s495 = sadd.s32 %s494, %s492
        %s496 = smul.addr %s495, 4
        %s497 = scalar_lea.vmem %s0, %s496
        %s498 = smul.u32 2, %s35
        %s499 = smul.u32 2, %s35
        %p500 = scmp.lt.s32.totalorder %s499, 3
        %s501 = scalar_select %p500, %s499, 3
        %s502 = smul.addr %s501, 4
        %s503 = scalar_lea.vmem %s1, %s502
        %s504 = smul.u32 2, %s35
        %s505 = smul.u32 2, %s35
        %p506 = scmp.lt.s32.totalorder %s505, 3
        %s507 = scalar_select %p506, %s505, 3
        %s508 = smul.addr %s507, 4
        %s509 = scalar_lea.vmem %s2, %s508
        %s510 = smul.u32 2, %s35
        %s511 = smul.u32 2, %s35
        %s512 = smul.u32 2, %s35
        %v514 = vld [vmem:[%s497] sm:$0xf]
        %v515 = vld [vmem:[%s497 + $0x4] sm:$0xf]
        %v516 = vunpack.c.l.bf16 %v514
        %v517 = vunpack.c.l.bf16 %v515
        %v518 = vpack.c.bf16 %v517, %v516
        %v519 = vld [vmem:[%s503] sm:$0xf]
        %v520 = vld [vmem:[%s503 + $0x4] sm:$0xf]
        %v521 = vunpack.c.l.bf16 %v519
        %v522 = vunpack.c.l.bf16 %v520
        %v523 = vpack.c.bf16 %v522, %v521
        %v524 = vld [vmem:[%s509] sm:$0xf]
        %v525 = vld [vmem:[%s509 + $0x4] sm:$0xf]
        %v526 = vunpack.c.l.bf16 %v524
        %v527 = vunpack.c.l.bf16 %v525
        %v528 = vpack.c.bf16 %v527, %v526
        %v529 = vld [vmem:[%s3] sm:$0xf]
        %v530 = vld [vmem:[%s3 + $0x4] sm:$0xf]
        %v531 = vld [vmem:[%s3 + $0x8] sm:$0xf]
        %v532 = vld [vmem:[%s3 + $0xc] sm:$0xf]
        %v537 = vunpack.c.l.b16 %v529
        %v538 = vunpack.c.l.b16 %v530
        %v539 = vunpack.c.l.b16 %v531
        %v540 = vunpack.c.l.b16 %v532
        %v541 = vpack.c.b16 %v538, %v537
        %v542 = vpack.c.b16 %v540, %v539
        %vm545 = vcmask 261120
        %v547 = vsel %vm545, %v518, 0
        %549 = vmatprep.subr.bf16.mxu0 0
        %550 = vmatpush1.bf16.msra.mxu0 %v541
        %551 = vmatprep.subr.bf16.mxu0 0
        %552 = vmatpush1.bf16.msra.mxu0 %v542
        %553 = vmatprep.subr.bf16.mxu0 0
        %554 = vmatpush1.bf16.msra.mxu0 0
        %555 = vmatprep.subr.bf16.mxu0 0
        %556 = vmatpush1.bf16.msra.mxu0 0
        %557 = vmatprep.subr.bf16.mxu0 0
        %558 = vmatpush1.bf16.msra.mxu0 0
        %559 = vmatprep.subr.bf16.mxu0 0
        %560 = vmatpush1.bf16.msra.mxu0 0
        %561 = vmatprep.subr.bf16.mxu0 0
        %562 = vmatpush1.bf16.msra.mxu0 0
        %563 = vmatprep.subr.bf16.mxu0 0
        %564 = vmatpush1.bf16.msra.mxu0 0
        %565 = vmatprep.subr.bf16.mxu0 0
        %566 = vmatpush1.bf16.msra.mxu0 0
        %567 = vmatprep.subr.bf16.mxu0 0
        %568 = vmatpush1.bf16.msra.mxu0 0
        %569 = vmatprep.subr.bf16.mxu0 0
        %570 = vmatpush1.bf16.msra.mxu0 0
        %571 = vmatprep.subr.bf16.mxu0 0
        %572 = vmatpush1.bf16.msra.mxu0 0
        %573 = vmatprep.subr.bf16.mxu0 0
        %574 = vmatpush1.bf16.msra.mxu0 0
        %575 = vmatprep.subr.bf16.mxu0 0
        %576 = vmatpush1.bf16.msra.mxu0 0
        %577 = vmatprep.subr.bf16.mxu0 0
        %578 = vmatpush1.bf16.msra.mxu0 0
        %579 = vmatprep.subr.bf16.mxu0 0
        %580 = vmatpush1.bf16.msra.mxu0 0
        %581 = vmatprep.mubr.bf16.mxu0 0
        %582 = vmatmul.mubr.bf16.gmra.mrb[0].mxu0 %v547
        %v583 = vpop.f32.mrb[0].mxu0
        %v584 = vadd.f32 0.0, %v583
        %v585 = vpop.f32.mrb[0].mxu0
        %v586 = vpop.f32.mrb[0].mxu0
        %v587 = vadd.f32 0.0, %v586
        %v588 = vpop.f32.mrb[0].mxu0
        %589 = vdwg.mxu0
        %v590 = vld [vmem:[%s4] sm:$0xf]
        %v591 = vld [vmem:[%s4 + $0x4] sm:$0xf]
        %v592 = vld [vmem:[%s4 + $0x8] sm:$0xf]
        %v596 = vunpack.c.l.b16 %v590
        %v597 = vunpack.c.l.b16 %v591
        %v598 = vunpack.c.l.b16 %v592
        %v599 = vpack.c.b16 %v597, %v596
        %v600 = vpack.c.b16 %v598, %v598
        %vm602 = vcmask 195584
        %v604 = vsel %vm602, %v523, 0
        %vm606 = vcmask 1043456
        %v608 = vsel %vm606, %v600, 0
        %610 = vmatprep.subr.bf16.mxu0 0
        %611 = vmatpush1.bf16.msra.mxu0 %v599
        %612 = vmatprep.subr.bf16.mxu0 0
        %613 = vmatpush1.bf16.msra.mxu0 %v608
        %614 = vmatprep.subr.bf16.mxu0 0
        %615 = vmatpush1.bf16.msra.mxu0 0
        %616 = vmatprep.subr.bf16.mxu0 0
        %617 = vmatpush1.bf16.msra.mxu0 0
        %618 = vmatprep.subr.bf16.mxu0 0
        %619 = vmatpush1.bf16.msra.mxu0 0
        %620 = vmatprep.subr.bf16.mxu0 0
        %621 = vmatpush1.bf16.msra.mxu0 0
        %622 = vmatprep.subr.bf16.mxu0 0
        %623 = vmatpush1.bf16.msra.mxu0 0
        %624 = vmatprep.subr.bf16.mxu0 0
        %625 = vmatpush1.bf16.msra.mxu0 0
        %626 = vmatprep.subr.bf16.mxu0 0
        %627 = vmatpush1.bf16.msra.mxu0 0
        %628 = vmatprep.subr.bf16.mxu0 0
        %629 = vmatpush1.bf16.msra.mxu0 0
        %630 = vmatprep.subr.bf16.mxu0 0
        %631 = vmatpush1.bf16.msra.mxu0 0
        %632 = vmatprep.subr.bf16.mxu0 0
        %633 = vmatpush1.bf16.msra.mxu0 0
        %634 = vmatprep.subr.bf16.mxu0 0
        %635 = vmatpush1.bf16.msra.mxu0 0
        %636 = vmatprep.subr.bf16.mxu0 0
        %637 = vmatpush1.bf16.msra.mxu0 0
        %638 = vmatprep.subr.bf16.mxu0 0
        %639 = vmatpush1.bf16.msra.mxu0 0
        %640 = vmatprep.subr.bf16.mxu0 0
        %641 = vmatpush1.bf16.msra.mxu0 0
        %642 = vmatprep.mubr.bf16.mxu0 0
        %643 = vmatmul.mubr.bf16.gmra.mrb[0].mxu0 %v604
        %v644 = vpop.f32.mrb[0].mxu0
        %v645 = vadd.f32 0.0, %v644
        %v646 = vpop.f32.mrb[0].mxu0
        %v647 = vpop.f32.mrb[0].mxu0
        %v648 = vadd.f32 0.0, %v647
        %v649 = vpop.f32.mrb[0].mxu0
        %650 = vdwg.mxu0
        %v651 = vld [vmem:[#allocation3] sm:$0xf]
        %v652 = vld [vmem:[#allocation3 + $0x4] sm:$0xf]
        %v653 = vld [vmem:[#allocation3 + $0x8] sm:$0xf]
        %v657 = vunpack.c.l.b16 %v651
        %v658 = vunpack.c.l.b16 %v652
        %v659 = vunpack.c.l.b16 %v653
        %v660 = vpack.c.b16 %v658, %v657
        %v661 = vpack.c.b16 %v659, %v659
        %v664 = vsel %vm602, %v528, 0
        %v667 = vsel %vm606, %v661, 0
        %669 = vmatprep.subr.bf16.mxu0 0
        %670 = vmatpush1.bf16.msra.mxu0 %v660
        %671 = vmatprep.subr.bf16.mxu0 0
        %672 = vmatpush1.bf16.msra.mxu0 %v667
        %673 = vmatprep.subr.bf16.mxu0 0
        %674 = vmatpush1.bf16.msra.mxu0 0
        %675 = vmatprep.subr.bf16.mxu0 0
        %676 = vmatpush1.bf16.msra.mxu0 0
        %677 = vmatprep.subr.bf16.mxu0 0
        %678 = vmatpush1.bf16.msra.mxu0 0
        %679 = vmatprep.subr.bf16.mxu0 0
        %680 = vmatpush1.bf16.msra.mxu0 0
        %681 = vmatprep.subr.bf16.mxu0 0
        %682 = vmatpush1.bf16.msra.mxu0 0
        %683 = vmatprep.subr.bf16.mxu0 0
        %684 = vmatpush1.bf16.msra.mxu0 0
        %685 = vmatprep.subr.bf16.mxu0 0
        %686 = vmatpush1.bf16.msra.mxu0 0
        %687 = vmatprep.subr.bf16.mxu0 0
        %688 = vmatpush1.bf16.msra.mxu0 0
        %689 = vmatprep.subr.bf16.mxu0 0
        %690 = vmatpush1.bf16.msra.mxu0 0
        %691 = vmatprep.subr.bf16.mxu0 0
        %692 = vmatpush1.bf16.msra.mxu0 0
        %693 = vmatprep.subr.bf16.mxu0 0
        %694 = vmatpush1.bf16.msra.mxu0 0
        %695 = vmatprep.subr.bf16.mxu0 0
        %696 = vmatpush1.bf16.msra.mxu0 0
        %697 = vmatprep.subr.bf16.mxu0 0
        %698 = vmatpush1.bf16.msra.mxu0 0
        %699 = vmatprep.subr.bf16.mxu0 0
        %700 = vmatpush1.bf16.msra.mxu0 0
        %701 = vmatprep.mubr.bf16.mxu0 0
        %702 = vmatmul.mubr.bf16.gmra.mrb[0].mxu0 %v664
        %v703 = vpop.f32.mrb[0].mxu0
        %v704 = vadd.f32 0.0, %v703
        %v705 = vpop.f32.mrb[0].mxu0
        %v706 = vpop.f32.mrb[0].mxu0
        %v707 = vadd.f32 0.0, %v706
        %v708 = vpop.f32.mrb[0].mxu0
        %709 = vdwg.mxu0
        %v710 = vmul.f32 %v584, 0.35355338
        %v711 = vmul.f32 %v587, 0.35355338
        %v712 = vpack.c.bf16 %v710, %v710
        %v713 = vpack.c.bf16 %v711, %v711
        %v714 = vpack.c.bf16 %v645, %v645
        %v715 = vpack.c.bf16 %v648, %v648
        %v716 = vpack.c.bf16 %v704, %v704
        %v717 = vpack.c.bf16 %v707, %v707
        %vm718 = vcmask 64512
        %v720 = vsel %vm718, %v712, 0
        %v723 = vsel %vm718, %v714, 0
        %725 = vmatprep.subr.bf16.mxu0 0
        %726 = vmatpush1.bf16.xpose.msra.mxu0 %v723
        %727 = vmatprep.subr.bf16.mxu0 0
        %728 = vmatpush1.bf16.xpose.msra.mxu0 0
        %729 = vmatprep.subr.bf16.mxu0 0
        %730 = vmatpush1.bf16.xpose.msra.mxu0 0
        %731 = vmatprep.subr.bf16.mxu0 0
        %732 = vmatpush1.bf16.xpose.msra.mxu0 0
        %733 = vmatprep.subr.bf16.mxu0 0
        %734 = vmatpush1.bf16.xpose.msra.mxu0 0
        %735 = vmatprep.subr.bf16.mxu0 0
        %736 = vmatpush1.bf16.xpose.msra.mxu0 0
        %737 = vmatprep.subr.bf16.mxu0 0
        %738 = vmatpush1.bf16.xpose.msra.mxu0 0
        %739 = vmatprep.subr.bf16.mxu0 0
        %740 = vmatpush1.bf16.xpose.msra.mxu0 0
        %741 = vmatprep.subr.bf16.mxu0 0
        %742 = vmatpush1.bf16.xpose.msra.mxu0 0
        %743 = vmatprep.subr.bf16.mxu0 0
        %744 = vmatpush1.bf16.xpose.msra.mxu0 0
        %745 = vmatprep.subr.bf16.mxu0 0
        %746 = vmatpush1.bf16.xpose.msra.mxu0 0
        %747 = vmatprep.subr.bf16.mxu0 0
        %748 = vmatpush1.bf16.xpose.msra.mxu0 0
        %749 = vmatprep.subr.bf16.mxu0 0
        %750 = vmatpush1.bf16.xpose.msra.mxu0 0
        %751 = vmatprep.subr.bf16.mxu0 0
        %752 = vmatpush1.bf16.xpose.msra.mxu0 0
        %753 = vmatprep.subr.bf16.mxu0 0
        %754 = vmatpush1.bf16.xpose.msra.mxu0 0
        %755 = vmatprep.subr.bf16.mxu0 0
        %756 = vmatpush1.bf16.xpose.msra.mxu0 0
        %757 = vmatprep.mubr.bf16.mxu0 0
        %758 = vmatmul.mubr.bf16.gmra.mrb[0].mxu0 %v720
        %v759 = vpop.f32.mrb[0].mxu0
        %v760 = vadd.f32 0.0, %v759
        %v761 = vpop.f32.mrb[0].mxu0
        %v762 = vpop.f32.mrb[0].mxu0
        %v763 = vpop.f32.mrb[0].mxu0
        %764 = vdwg.mxu0
        %v766 = vsel %vm718, %v713, 0
        %v769 = vsel %vm718, %v715, 0
        %771 = vmatprep.subr.bf16.mxu0 0
        %772 = vmatpush1.bf16.xpose.msra.mxu0 %v769
        %773 = vmatprep.subr.bf16.mxu0 0
        %774 = vmatpush1.bf16.xpose.msra.mxu0 0
        %775 = vmatprep.subr.bf16.mxu0 0
        %776 = vmatpush1.bf16.xpose.msra.mxu0 0
        %777 = vmatprep.subr.bf16.mxu0 0
        %778 = vmatpush1.bf16.xpose.msra.mxu0 0
        %779 = vmatprep.subr.bf16.mxu0 0
        %780 = vmatpush1.bf16.xpose.msra.mxu0 0
        %781 = vmatprep.subr.bf16.mxu0 0
        %782 = vmatpush1.bf16.xpose.msra.mxu0 0
        %783 = vmatprep.subr.bf16.mxu0 0
        %784 = vmatpush1.bf16.xpose.msra.mxu0 0
        %785 = vmatprep.subr.bf16.mxu0 0
        %786 = vmatpush1.bf16.xpose.msra.mxu0 0
        %787 = vmatprep.subr.bf16.mxu0 0
        %788 = vmatpush1.bf16.xpose.msra.mxu0 0
        %789 = vmatprep.subr.bf16.mxu0 0
        %790 = vmatpush1.bf16.xpose.msra.mxu0 0
        %791 = vmatprep.subr.bf16.mxu0 0
        %792 = vmatpush1.bf16.xpose.msra.mxu0 0
        %793 = vmatprep.subr.bf16.mxu0 0
        %794 = vmatpush1.bf16.xpose.msra.mxu0 0
        %795 = vmatprep.subr.bf16.mxu0 0
        %796 = vmatpush1.bf16.xpose.msra.mxu0 0
        %797 = vmatprep.subr.bf16.mxu0 0
        %798 = vmatpush1.bf16.xpose.msra.mxu0 0
        %799 = vmatprep.subr.bf16.mxu0 0
        %800 = vmatpush1.bf16.xpose.msra.mxu0 0
        %801 = vmatprep.subr.bf16.mxu0 0
        %802 = vmatpush1.bf16.xpose.msra.mxu0 0
        %803 = vmatprep.mubr.bf16.mxu0 0
        %804 = vmatmul.mubr.bf16.gmra.mrb[0].mxu0 %v766
        %v805 = vpop.f32.mrb[0].mxu0
        %v806 = vadd.f32 0.0, %v805
        %v807 = vpop.f32.mrb[0].mxu0
        %v808 = vpop.f32.mrb[0].mxu0
        %v809 = vpop.f32.mrb[0].mxu0
        %810 = vdwg.mxu0
        %v811 = vsel %vm718, %v760, -inf
        %812 = vmax.xlane.f32.xlu0 %v811
        %v813 = vpop.xlane.xlu0 %812
        %v814 = vsel %vm718, %v806, -inf
        %815 = vmax.xlane.f32.xlu0 %v814
        %v816 = vpop.xlane.xlu0 %815
        %v817 = vsub.f32 %v760, %v813
        %v818 = vsub.f32 %v806, %v816
        %v819 = vmul.f32 %v817, 1.442695
        %v820 = vpow.pop %v819
        %v821 = vmul.f32 %v818, 1.442695
        %v822 = vpow.pop %v821
        %v823 = vsel %vm718, %v820, 0.0
        %824 = vadd.xlane.f32.xlu0 %v823
        %v825 = vpop.xlane.xlu0 %824
        %v826 = vsel %vm718, %v822, 0.0
        %827 = vadd.xlane.f32.xlu0 %v826
        %v828 = vpop.xlane.xlu0 %827
        %v829 = vrcp.pop %v825
        %v830 = vrcp.pop %v828
        %v831 = vmul.f32 %v820, %v829
        %v832 = vmul.f32 %v822, %v830
        %833 = vst.msk [vmem:[%s489] sm:$0xff] %vm718, %v831
        %834 = vst.msk [vmem:[%s489 + $0x10] sm:$0xff] %vm718, %v832
        %v835 = vpack.c.bf16 %v831, %v831
        %v836 = vpack.c.bf16 %v832, %v832
        %v838 = vsel %vm718, %v835, 0
        %v841 = vsel %vm606, %v716, 0
        %843 = vmatprep.subr.bf16.mxu0 0
        %844 = vmatpush1.bf16.msra.mxu0 %v841
        %845 = vmatprep.subr.bf16.mxu0 0
        %846 = vmatpush1.bf16.msra.mxu0 0
        %847 = vmatprep.subr.bf16.mxu0 0
        %848 = vmatpush1.bf16.msra.mxu0 0
        %849 = vmatprep.subr.bf16.mxu0 0
        %850 = vmatpush1.bf16.msra.mxu0 0
        %851 = vmatprep.subr.bf16.mxu0 0
        %852 = vmatpush1.bf16.msra.mxu0 0
        %853 = vmatprep.subr.bf16.mxu0 0
        %854 = vmatpush1.bf16.msra.mxu0 0
        %855 = vmatprep.subr.bf16.mxu0 0
        %856 = vmatpush1.bf16.msra.mxu0 0
        %857 = vmatprep.subr.bf16.mxu0 0
        %858 = vmatpush1.bf16.msra.mxu0 0
        %859 = vmatprep.subr.bf16.mxu0 0
        %860 = vmatpush1.bf16.msra.mxu0 0
        %861 = vmatprep.subr.bf16.mxu0 0
        %862 = vmatpush1.bf16.msra.mxu0 0
        %863 = vmatprep.subr.bf16.mxu0 0
        %864 = vmatpush1.bf16.msra.mxu0 0
        %865 = vmatprep.subr.bf16.mxu0 0
        %866 = vmatpush1.bf16.msra.mxu0 0
        %867 = vmatprep.subr.bf16.mxu0 0
        %868 = vmatpush1.bf16.msra.mxu0 0
        %869 = vmatprep.subr.bf16.mxu0 0
        %870 = vmatpush1.bf16.msra.mxu0 0
        %871 = vmatprep.subr.bf16.mxu0 0
        %872 = vmatpush1.bf16.msra.mxu0 0
        %873 = vmatprep.subr.bf16.mxu0 0
        %874 = vmatpush1.bf16.msra.mxu0 0
        %875 = vmatprep.mubr.bf16.mxu0 0
        %876 = vmatmul.mubr.bf16.gmra.mrb[0].mxu0 %v838
        %v877 = vpop.f32.mrb[0].mxu0
        %v878 = vadd.f32 0.0, %v877
        %v879 = vpop.f32.mrb[0].mxu0
        %v880 = vpop.f32.mrb[0].mxu0
        %v881 = vpop.f32.mrb[0].mxu0
        %882 = vdwg.mxu0
        %v884 = vsel %vm718, %v836, 0
        %v887 = vsel %vm606, %v717, 0
        %889 = vmatprep.subr.bf16.mxu0 0
        %890 = vmatpush1.bf16.msra.mxu0 %v887
        %891 = vmatprep.subr.bf16.mxu0 0
        %892 = vmatpush1.bf16.msra.mxu0 0
        %893 = vmatprep.subr.bf16.mxu0 0
        %894 = vmatpush1.bf16.msra.mxu0 0
        %895 = vmatprep.subr.bf16.mxu0 0
        %896 = vmatpush1.bf16.msra.mxu0 0
        %897 = vmatprep.subr.bf16.mxu0 0
        %898 = vmatpush1.bf16.msra.mxu0 0
        %899 = vmatprep.subr.bf16.mxu0 0
        %900 = vmatpush1.bf16.msra.mxu0 0
        %901 = vmatprep.subr.bf16.mxu0 0
        %902 = vmatpush1.bf16.msra.mxu0 0
        %903 = vmatprep.subr.bf16.mxu0 0
        %904 = vmatpush1.bf16.msra.mxu0 0
        %905 = vmatprep.subr.bf16.mxu0 0
        %906 = vmatpush1.bf16.msra.mxu0 0
        %907 = vmatprep.subr.bf16.mxu0 0
        %908 = vmatpush1.bf16.msra.mxu0 0
        %909 = vmatprep.subr.bf16.mxu0 0
        %910 = vmatpush1.bf16.msra.mxu0 0
        %911 = vmatprep.subr.bf16.mxu0 0
        %912 = vmatpush1.bf16.msra.mxu0 0
        %913 = vmatprep.subr.bf16.mxu0 0
        %914 = vmatpush1.bf16.msra.mxu0 0
        %915 = vmatprep.subr.bf16.mxu0 0
        %916 = vmatpush1.bf16.msra.mxu0 0
        %917 = vmatprep.subr.bf16.mxu0 0
        %918 = vmatpush1.bf16.msra.mxu0 0
        %919 = vmatprep.subr.bf16.mxu0 0
        %920 = vmatpush1.bf16.msra.mxu0 0
        %921 = vmatprep.mubr.bf16.mxu0 0
        %922 = vmatmul.mubr.bf16.gmra.mrb[0].mxu0 %v884
        %v923 = vpop.f32.mrb[0].mxu0
        %v924 = vadd.f32 0.0, %v923
        %v925 = vpop.f32.mrb[0].mxu0
        %v926 = vpop.f32.mrb[0].mxu0
        %v927 = vpop.f32.mrb[0].mxu0
        %928 = vdwg.mxu0
        %vm929 = vcmask 130048
        %930 = vst.msk [vmem:[#allocation2] sm:$0xff] %vm929, %v878
        %931 = vst.msk [vmem:[#allocation2 + $0x8] sm:$0xff] %vm929, %v924
        %933 = vrot.lane.b32.xlu0 %v712, 120
        %v934 = vpop.permute.xlu0 %933
        %936 = vrot.lane.b32.xlu0 %v714, 120
        %v937 = vpop.permute.xlu0 %936
        %v939 = vsel %vm718, %v934, 0
        %v942 = vsel %vm718, %v937, 0
        %944 = vmatprep.subr.bf16.mxu0 0
        %945 = vmatpush1.bf16.xpose.msra.mxu0 %v942
        %946 = vmatprep.subr.bf16.mxu0 0
        %947 = vmatpush1.bf16.xpose.msra.mxu0 0
        %948 = vmatprep.subr.bf16.mxu0 0
        %949 = vmatpush1.bf16.xpose.msra.mxu0 0
        %950 = vmatprep.subr.bf16.mxu0 0
        %951 = vmatpush1.bf16.xpose.msra.mxu0 0
        %952 = vmatprep.subr.bf16.mxu0 0
        %953 = vmatpush1.bf16.xpose.msra.mxu0 0
        %954 = vmatprep.subr.bf16.mxu0 0
        %955 = vmatpush1.bf16.xpose.msra.mxu0 0
        %956 = vmatprep.subr.bf16.mxu0 0
        %957 = vmatpush1.bf16.xpose.msra.mxu0 0
        %958 = vmatprep.subr.bf16.mxu0 0
        %959 = vmatpush1.bf16.xpose.msra.mxu0 0
        %960 = vmatprep.subr.bf16.mxu0 0
        %961 = vmatpush1.bf16.xpose.msra.mxu0 0
        %962 = vmatprep.subr.bf16.mxu0 0
        %963 = vmatpush1.bf16.xpose.msra.mxu0 0
        %964 = vmatprep.subr.bf16.mxu0 0
        %965 = vmatpush1.bf16.xpose.msra.mxu0 0
        %966 = vmatprep.subr.bf16.mxu0 0
        %967 = vmatpush1.bf16.xpose.msra.mxu0 0
        %968 = vmatprep.subr.bf16.mxu0 0
        %969 = vmatpush1.bf16.xpose.msra.mxu0 0
        %970 = vmatprep.subr.bf16.mxu0 0
        %971 = vmatpush1.bf16.xpose.msra.mxu0 0
        %972 = vmatprep.subr.bf16.mxu0 0
        %973 = vmatpush1.bf16.xpose.msra.mxu0 0
        %974 = vmatprep.subr.bf16.mxu0 0
        %975 = vmatpush1.bf16.xpose.msra.mxu0 0
        %976 = vmatprep.mubr.bf16.mxu0 0
        %977 = vmatmul.mubr.bf16.gmra.mrb[0].mxu0 %v939
        %v978 = vpop.f32.mrb[0].mxu0
        %v979 = vadd.f32 0.0, %v978
        %v980 = vpop.f32.mrb[0].mxu0
        %v981 = vpop.f32.mrb[0].mxu0
        %v982 = vpop.f32.mrb[0].mxu0
        %983 = vdwg.mxu0
        %985 = vrot.lane.b32.xlu0 %v713, 120
        %v986 = vpop.permute.xlu0 %985
        %988 = vrot.lane.b32.xlu0 %v715, 120
        %v989 = vpop.permute.xlu0 %988
        %v991 = vsel %vm718, %v986, 0
        %v994 = vsel %vm718, %v989, 0
        %996 = vmatprep.subr.bf16.mxu0 0
        %997 = vmatpush1.bf16.xpose.msra.mxu0 %v994
        %998 = vmatprep.subr.bf16.mxu0 0
        %999 = vmatpush1.bf16.xpose.msra.mxu0 0
        %1000 = vmatprep.subr.bf16.mxu0 0
        %1001 = vmatpush1.bf16.xpose.msra.mxu0 0
        %1002 = vmatprep.subr.bf16.mxu0 0
        %1003 = vmatpush1.bf16.xpose.msra.mxu0 0
        %1004 = vmatprep.subr.bf16.mxu0 0
        %1005 = vmatpush1.bf16.xpose.msra.mxu0 0
        %1006 = vmatprep.subr.bf16.mxu0 0
        %1007 = vmatpush1.bf16.xpose.msra.mxu0 0
        %1008 = vmatprep.subr.bf16.mxu0 0
        %1009 = vmatpush1.bf16.xpose.msra.mxu0 0
        %1010 = vmatprep.subr.bf16.mxu0 0
        %1011 = vmatpush1.bf16.xpose.msra.mxu0 0
        %1012 = vmatprep.subr.bf16.mxu0 0
        %1013 = vmatpush1.bf16.xpose.msra.mxu0 0
        %1014 = vmatprep.subr.bf16.mxu0 0
        %1015 = vmatpush1.bf16.xpose.msra.mxu0 0
        %1016 = vmatprep.subr.bf16.mxu0 0
        %1017 = vmatpush1.bf16.xpose.msra.mxu0 0
        %1018 = vmatprep.subr.bf16.mxu0 0
        %1019 = vmatpush1.bf16.xpose.msra.mxu0 0
        %1020 = vmatprep.subr.bf16.mxu0 0
        %1021 = vmatpush1.bf16.xpose.msra.mxu0 0
        %1022 = vmatprep.subr.bf16.mxu0 0
        %1023 = vmatpush1.bf16.xpose.msra.mxu0 0
        %1024 = vmatprep.subr.bf16.mxu0 0
        %1025 = vmatpush1.bf16.xpose.msra.mxu0 0
        %1026 = vmatprep.subr.bf16.mxu0 0
        %1027 = vmatpush1.bf16.xpose.msra.mxu0 0
        %1028 = vmatprep.mubr.bf16.mxu0 0
        %1029 = vmatmul.mubr.bf16.gmra.mrb[0].mxu0 %v991
        %v1030 = vpop.f32.mrb[0].mxu0
        %v1031 = vadd.f32 0.0, %v1030
        %v1032 = vpop.f32.mrb[0].mxu0
        %v1033 = vpop.f32.mrb[0].mxu0
        %v1034 = vpop.f32.mrb[0].mxu0
        %1035 = vdwg.mxu0
        %v1036 = vsel %vm718, %v979, -inf
        %1037 = vmax.xlane.f32.xlu0 %v1036
        %v1038 = vpop.xlane.xlu0 %1037
        %v1039 = vsel %vm718, %v1031, -inf
        %1040 = vmax.xlane.f32.xlu0 %v1039
        %v1041 = vpop.xlane.xlu0 %1040
        %v1042 = vsub.f32 %v979, %v1038
        %v1043 = vsub.f32 %v1031, %v1041
        %v1044 = vmul.f32 %v1042, 1.442695
        %v1045 = vpow.pop %v1044
        %v1046 = vmul.f32 %v1043, 1.442695
        %v1047 = vpow.pop %v1046
        %v1048 = vsel %vm718, %v1045, 0.0
        %1049 = vadd.xlane.f32.xlu0 %v1048
        %v1050 = vpop.xlane.xlu0 %1049
        %v1051 = vsel %vm718, %v1047, 0.0
        %1052 = vadd.xlane.f32.xlu0 %v1051
        %v1053 = vpop.xlane.xlu0 %1052
        %v1054 = vrcp.pop %v1050
        %v1055 = vrcp.pop %v1053
        %v1056 = vmul.f32 %v1045, %v1054
        %v1057 = vmul.f32 %v1047, %v1055
        %s1058 = scalar_lea.vmem %s489, 8 [#allocation7]
        %1059 = vst.msk [vmem:[%s1058] sm:$0xff] %vm718, %v1056
        %1060 = vst.msk [vmem:[%s1058 + $0x10] sm:$0xff] %vm718, %v1057
        %v1061 = vpack.c.bf16 %v1056, %v1056
        %v1062 = vpack.c.bf16 %v1057, %v1057
        %1064 = vrot.lane.b32.xlu0 %v716, 112
        %v1065 = vpop.permute.xlu0 %1064
        %v1067 = vsel %vm718, %v1061, 0
        %v1070 = vsel %vm606, %v1065, 0
        %1072 = vmatprep.subr.bf16.mxu0 0
        %1073 = vmatpush1.bf16.msra.mxu0 %v1070
        %1074 = vmatprep.subr.bf16.mxu0 0
        %1075 = vmatpush1.bf16.msra.mxu0 0
        %1076 = vmatprep.subr.bf16.mxu0 0
        %1077 = vmatpush1.bf16.msra.mxu0 0
        %1078 = vmatprep.subr.bf16.mxu0 0
        %1079 = vmatpush1.bf16.msra.mxu0 0
        %1080 = vmatprep.subr.bf16.mxu0 0
        %1081 = vmatpush1.bf16.msra.mxu0 0
        %1082 = vmatprep.subr.bf16.mxu0 0
        %1083 = vmatpush1.bf16.msra.mxu0 0
        %1084 = vmatprep.subr.bf16.mxu0 0
        %1085 = vmatpush1.bf16.msra.mxu0 0
        %1086 = vmatprep.subr.bf16.mxu0 0
        %1087 = vmatpush1.bf16.msra.mxu0 0
        %1088 = vmatprep.subr.bf16.mxu0 0
        %1089 = vmatpush1.bf16.msra.mxu0 0
        %1090 = vmatprep.subr.bf16.mxu0 0
        %1091 = vmatpush1.bf16.msra.mxu0 0
        %1092 = vmatprep.subr.bf16.mxu0 0
        %1093 = vmatpush1.bf16.msra.mxu0 0
        %1094 = vmatprep.subr.bf16.mxu0 0
        %1095 = vmatpush1.bf16.msra.mxu0 0
        %1096 = vmatprep.subr.bf16.mxu0 0
        %1097 = vmatpush1.bf16.msra.mxu0 0
        %1098 = vmatprep.subr.bf16.mxu0 0
        %1099 = vmatpush1.bf16.msra.mxu0 0
        %1100 = vmatprep.subr.bf16.mxu0 0
        %1101 = vmatpush1.bf16.msra.mxu0 0
        %1102 = vmatprep.subr.bf16.mxu0 0
        %1103 = vmatpush1.bf16.msra.mxu0 0
        %1104 = vmatprep.mubr.bf16.mxu0 0
        %1105 = vmatmul.mubr.bf16.gmra.mrb[0].mxu0 %v1067
        %v1106 = vpop.f32.mrb[0].mxu0
        %v1107 = vadd.f32 0.0, %v1106
        %v1108 = vpop.f32.mrb[0].mxu0
        %v1109 = vpop.f32.mrb[0].mxu0
        %v1110 = vpop.f32.mrb[0].mxu0
        %1111 = vdwg.mxu0
        %1113 = vrot.lane.b32.xlu0 %v717, 112
        %v1114 = vpop.permute.xlu0 %1113
        %v1116 = vsel %vm718, %v1062, 0
        %v1119 = vsel %vm606, %v1114, 0
        %1121 = vmatprep.subr.bf16.mxu0 0
        %1122 = vmatpush1.bf16.msra.mxu0 %v1119
        %1123 = vmatprep.subr.bf16.mxu0 0
        %1124 = vmatpush1.bf16.msra.mxu0 0
        %1125 = vmatprep.subr.bf16.mxu0 0
        %1126 = vmatpush1.bf16.msra.mxu0 0
        %1127 = vmatprep.subr.bf16.mxu0 0
        %1128 = vmatpush1.bf16.msra.mxu0 0
        %1129 = vmatprep.subr.bf16.mxu0 0
        %1130 = vmatpush1.bf16.msra.mxu0 0
        %1131 = vmatprep.subr.bf16.mxu0 0
        %1132 = vmatpush1.bf16.msra.mxu0 0
        %1133 = vmatprep.subr.bf16.mxu0 0
        %1134 = vmatpush1.bf16.msra.mxu0 0
        %1135 = vmatprep.subr.bf16.mxu0 0
        %1136 = vmatpush1.bf16.msra.mxu0 0
        %1137 = vmatprep.subr.bf16.mxu0 0
        %1138 = vmatpush1.bf16.msra.mxu0 0
        %1139 = vmatprep.subr.bf16.mxu0 0
        %1140 = vmatpush1.bf16.msra.mxu0 0
        %1141 = vmatprep.subr.bf16.mxu0 0
        %1142 = vmatpush1.bf16.msra.mxu0 0
        %1143 = vmatprep.subr.bf16.mxu0 0
        %1144 = vmatpush1.bf16.msra.mxu0 0
        %1145 = vmatprep.subr.bf16.mxu0 0
        %1146 = vmatpush1.bf16.msra.mxu0 0
        %1147 = vmatprep.subr.bf16.mxu0 0
        %1148 = vmatpush1.bf16.msra.mxu0 0
        %1149 = vmatprep.subr.bf16.mxu0 0
        %1150 = vmatpush1.bf16.msra.mxu0 0
        %1151 = vmatprep.subr.bf16.mxu0 0
        %1152 = vmatpush1.bf16.msra.mxu0 0
        %1153 = vmatprep.mubr.bf16.mxu0 0
        %1154 = vmatmul.mubr.bf16.gmra.mrb[0].mxu0 %v1116
        %v1155 = vpop.f32.mrb[0].mxu0
        %v1156 = vadd.f32 0.0, %v1155
        %v1157 = vpop.f32.mrb[0].mxu0
        %v1158 = vpop.f32.mrb[0].mxu0
        %v1159 = vpop.f32.mrb[0].mxu0
        %1160 = vdwg.mxu0
        %1163 = vrot.lane.b32.xlu0 %v1107, 16
        %v1164 = vpop.permute.xlu0 %1163
        %1165 = vrot.lane.b32.xlu0 %v1156, 16
        %v1166 = vpop.permute.xlu0 %1165
        %vm1169 = vcmask 261248
        %1170 = vst.msk [vmem:[#allocation2] sm:$0xff] %vm1169, %v1164
        %1171 = vst.msk [vmem:[#allocation2 + $0x8] sm:$0xff] %vm1169, %v1166
        %v1172 = vld [vmem:[#allocation2] sm:$0xff]
        %v1173 = vld [vmem:[#allocation2 + $0x8] sm:$0xff]
        %v1174 = vadd.f32 %v516, %v1172
        %v1175 = vadd.f32 %v517, %v1173
        %v1176 = vsel %vm545, %v1174, 0.0
        %1177 = vadd.xlane.f32.xlu0 %v1176
        %v1178 = vpop.xlane.xlu0 %1177
        %v1179 = vsel %vm545, %v1175, 0.0
        %1180 = vadd.xlane.f32.xlu0 %v1179
        %v1181 = vpop.xlane.xlu0 %1180
        %v1182 = vrcp.pop 32.0
        %v1183 = vmul.f32 %v1178, %v1182
        %v1184 = vmul.f32 %v1181, %v1182
        %v1185 = vsub.f32 %v1174, %v1183
        %v1186 = vsub.f32 %v1175, %v1184
        %v1187 = vmul.f32 %v1185, %v1185
        %v1188 = vmul.f32 %v1186, %v1186
        %v1189 = vsel %vm545, %v1187, 0.0
        %1190 = vadd.xlane.f32.xlu0 %v1189
        %v1191 = vpop.xlane.xlu0 %1190
        %v1192 = vsel %vm545, %v1188, 0.0
        %1193 = vadd.xlane.f32.xlu0 %v1192
        %v1194 = vpop.xlane.xlu0 %1193
        %v1195 = vmul.f32 %v1191, %v1182
        %v1196 = vmul.f32 %v1194, %v1182
        %v1197 = vadd.f32 %v1195, 1e-06
        %v1198 = vadd.f32 %v1196, 1e-06
        %v1199 = vrsqrt.pop %v1197
        %v1200 = vrsqrt.pop %v1198
        %v1201 = vmul.f32 %v1185, %v1199
        %v1202 = vmul.f32 %v1186, %v1200
        %v1203 = vld [vmem:[%s7] sm:$0x1]
        %v1205 = vlaneseq
        %v1206 = vshrl.u32 %v1205, 7
        %v1207 = vsub.s32 0, %v1206
        %v1208 = vrot.slane %v1203, %v1207
        %v1210 = vmul.f32 %v1201, %v1208
        %v1211 = vmul.f32 %v1202, %v1208
        %v1212 = vld [vmem:[%s8] sm:$0x1]
        %v1214 = vlaneseq
        %v1215 = vshrl.u32 %v1214, 7
        %v1216 = vsub.s32 0, %v1215
        %v1217 = vrot.slane %v1212, %v1216
        %v1219 = vadd.f32 %v1210, %v1217
        %v1220 = vadd.f32 %v1211, %v1217
        %v1221 = vpack.c.bf16 %v1220, %v1219
        %v1222 = vld [vmem:[%s6] sm:$0xf]
        %v1223 = vld [vmem:[%s6 + $0x4] sm:$0xf]
        %v1224 = vld [vmem:[%s6 + $0x8] sm:$0xf]
        %v1225 = vld [vmem:[%s6 + $0xc] sm:$0xf]
        %v1230 = vunpack.c.l.b16 %v1222
        %v1231 = vunpack.c.l.b16 %v1223
        %v1232 = vunpack.c.l.b16 %v1224
        %v1233 = vunpack.c.l.b16 %v1225
        %v1234 = vpack.c.b16 %v1231, %v1230
        %v1235 = vpack.c.b16 %v1233, %v1232
        %v1239 = vsel %vm545, %v1221, 0
        %1241 = vmatprep.subr.bf16.mxu0 0
        %1242 = vmatpush1.bf16.msra.mxu0 %v1234
        %1243 = vmatprep.subr.bf16.mxu0 0
        %1244 = vmatpush1.bf16.msra.mxu0 %v1235
        %1245 = vmatprep.subr.bf16.mxu0 0
        %1246 = vmatpush1.bf16.msra.mxu0 0
        %1247 = vmatprep.subr.bf16.mxu0 0
        %1248 = vmatpush1.bf16.msra.mxu0 0
        %1249 = vmatprep.subr.bf16.mxu0 0
        %1250 = vmatpush1.bf16.msra.mxu0 0
        %1251 = vmatprep.subr.bf16.mxu0 0
        %1252 = vmatpush1.bf16.msra.mxu0 0
        %1253 = vmatprep.subr.bf16.mxu0 0
        %1254 = vmatpush1.bf16.msra.mxu0 0
        %1255 = vmatprep.subr.bf16.mxu0 0
        %1256 = vmatpush1.bf16.msra.mxu0 0
        %1257 = vmatprep.subr.bf16.mxu0 0
        %1258 = vmatpush1.bf16.msra.mxu0 0
        %1259 = vmatprep.subr.bf16.mxu0 0
        %1260 = vmatpush1.bf16.msra.mxu0 0
        %1261 = vmatprep.subr.bf16.mxu0 0
        %1262 = vmatpush1.bf16.msra.mxu0 0
        %1263 = vmatprep.subr.bf16.mxu0 0
        %1264 = vmatpush1.bf16.msra.mxu0 0
        %1265 = vmatprep.subr.bf16.mxu0 0
        %1266 = vmatpush1.bf16.msra.mxu0 0
        %1267 = vmatprep.subr.bf16.mxu0 0
        %1268 = vmatpush1.bf16.msra.mxu0 0
        %1269 = vmatprep.subr.bf16.mxu0 0
        %1270 = vmatpush1.bf16.msra.mxu0 0
        %1271 = vmatprep.subr.bf16.mxu0 0
        %1272 = vmatpush1.bf16.msra.mxu0 0
        %1273 = vmatprep.mubr.bf16.mxu0 0
        %1274 = vmatmul.mubr.bf16.gmra.mrb[0].mxu0 %v1239
        %v1275 = vpop.f32.mrb[0].mxu0
        %v1276 = vadd.f32 0.0, %v1275
        %v1277 = vpop.f32.mrb[0].mxu0
        %v1278 = vpop.f32.mrb[0].mxu0
        %v1279 = vadd.f32 0.0, %v1278
        %v1280 = vpop.f32.mrb[0].mxu0
        %1281 = vdwg.mxu0
        %v1282 = vadd.f32 %v1219, %v1276
        %v1283 = vadd.f32 %v1220, %v1279
        %v1284 = vsel %vm545, %v1282, 0.0
        %1285 = vadd.xlane.f32.xlu0 %v1284
        %v1286 = vpop.xlane.xlu0 %1285
        %v1287 = vsel %vm545, %v1283, 0.0
        %1288 = vadd.xlane.f32.xlu0 %v1287
        %v1289 = vpop.xlane.xlu0 %1288
        %v1290 = vmul.f32 %v1286, %v1182
        %v1291 = vmul.f32 %v1289, %v1182
        %v1292 = vsub.f32 %v1282, %v1290
        %v1293 = vsub.f32 %v1283, %v1291
        %v1294 = vmul.f32 %v1292, %v1292
        %v1295 = vmul.f32 %v1293, %v1293
        %v1296 = vsel %vm545, %v1294, 0.0
        %1297 = vadd.xlane.f32.xlu0 %v1296
        %v1298 = vpop.xlane.xlu0 %1297
        %v1299 = vsel %vm545, %v1295, 0.0
        %1300 = vadd.xlane.f32.xlu0 %v1299
        %v1301 = vpop.xlane.xlu0 %1300
        %v1302 = vmul.f32 %v1298, %v1182
        %v1303 = vmul.f32 %v1301, %v1182
        %v1304 = vadd.f32 %v1302, 1e-06
        %v1305 = vadd.f32 %v1303, 1e-06
        %v1306 = vrsqrt.pop %v1304
        %v1307 = vrsqrt.pop %v1305
        %v1308 = vmul.f32 %v1292, %v1306
        %v1309 = vmul.f32 %v1293, %v1307
        %v1310 = vld [vmem:[%s9] sm:$0x1]
        %v1312 = vlaneseq
        %v1313 = vshrl.u32 %v1312, 7
        %v1314 = vsub.s32 0, %v1313
        %v1315 = vrot.slane %v1310, %v1314
        %v1317 = vmul.f32 %v1308, %v1315
        %v1318 = vmul.f32 %v1309, %v1315
        %v1319 = vld [vmem:[%s10] sm:$0x1]
        %v1321 = vlaneseq
        %v1322 = vshrl.u32 %v1321, 7
        %v1323 = vsub.s32 0, %v1322
        %v1324 = vrot.slane %v1319, %v1323
        %v1326 = vadd.f32 %v1317, %v1324
        %v1327 = vadd.f32 %v1318, %v1324
        %1328 = vst.msk [vmem:[%s482] sm:$0xff] %vm545, %v1326
        %1329 = vst.msk [vmem:[%s482 + $0x8] sm:$0xff] %vm545, %v1327
        %s1330 = sand.u32 %s301, 1
        %s1331 = scalar_lea.sflag [#allocation5], %s1330
        %s1332 = sand.u32 %s301, 1
        %s1333 = smul.addr %s1332, 16
        %s1334 = scalar_lea.vmem [#allocation6], %s1333
        %s1335 = sand.u32 %s329, 1
        %s1336 = scalar_lea.sflag [#allocation8], %s1335
        %s1337 = sand.u32 %s329, 1
        %s1338 = smul.addr %s1337, 32
        %s1339 = scalar_lea.vmem [#allocation7], %s1338
        // Predicated region
        $region69: #{tpu_custom_call.1} parent=63 // pred_check
          %p1340 = pneg %p311
        $region70: #{tpu_custom_call.1} parent=63 // pred_check_branch
          %1342 = sbr.rel (%p1340) target = $region72
        $region71: #{tpu_custom_call.1} parent=63 // pred_region
          %s1343 = smul.u32 2, %s35
          %s1345 = ssub.s32 256, 256
          %1346 = vsyncadd %s1331, %s1345
          %s1347 = sadd.s32 %s36, %s1343
          %s1348 = smul.addr %s1347, 128
          %s1349 = scalar_lea.hbm %s11, %s1348
          %s1350 = sshll.u32 %s1334, 4
          %s1351 = int_to_ptr.vmem [resolvable:$true] %s1350
          %1356 = dma.vmem_to_hbm [thread:$0]  %s1351, 256, %s1349, %s1331, 128, 128, 8
        $region72: #{tpu_custom_call.1} parent=63 // pred_fallthru
          _
        // Predicated region
        $region73: #{tpu_custom_call.1} parent=63 // pred_check
          %p1357 = pneg %p339
        $region74: #{tpu_custom_call.1} parent=63 // pred_check_branch
          %1359 = sbr.rel (%p1357) target = $region76
        $region75: #{tpu_custom_call.1} parent=63 // pred_region
          %s1360 = smul.u32 2, %s35
          %s1362 = ssub.s32 512, 512
          %1363 = vsyncadd %s1336, %s1362
          %s1364 = smul.addr %s1360, 2
          %s1365 = sadd.s32 %s36, %s1364
          %s1366 = smul.addr %s1365, 128
          %s1367 = scalar_lea.hbm %s12, %s1366
          %s1368 = sshll.u32 %s1339, 4
          %s1369 = int_to_ptr.vmem [resolvable:$true] %s1368
          %1374 = dma.vmem_to_hbm [thread:$0]  %s1369, 512, %s1367, %s1336, 128, 128, 8
        $region76: #{tpu_custom_call.1} parent=63 // pred_fallthru
          _
      $region64: #{tpu_custom_call.1} parent=5 // pred_fallthru
        _
      %p1375 = scmp.le.s32.totalorder 2, %s26
      // Predicated region
      $region77: #{tpu_custom_call.1} parent=5 // pred_check
        %p1376 = pneg %p1375
      $region78: #{tpu_custom_call.1} parent=5 // pred_check_branch
        %1378 = sbr.rel (%p1376) target = $region80
      $region79: #{tpu_custom_call.1} parent=5 // pred_region
        %s1379 = ssub.s32 %s26, 2
        // Predicated region
        $region81: #{tpu_custom_call.1} parent=79 // pred_check
          %p1380 = pneg %p317
        $region82: #{tpu_custom_call.1} parent=79 // pred_check_branch
          %1382 = sbr.rel (%p1380) target = $region84
        $region83: #{tpu_custom_call.1} parent=79 // pred_region
          %s1383 = sand.u32 %s302, 1
          %s1384 = scalar_lea.sflag [#allocation5], %s1383
          %s1385 = sand.u32 %s302, 1
          %s1386 = smul.addr %s1385, 16
          %s1387 = scalar_lea.vmem [#allocation6], %s1386
          %1388 = dma.done %s1384, 256
        $region84: #{tpu_custom_call.1} parent=79 // pred_fallthru
          _
        // Predicated region
        $region85: #{tpu_custom_call.1} parent=79 // pred_check
          %p1389 = pneg %p345
        $region86: #{tpu_custom_call.1} parent=79 // pred_check_branch
          %1391 = sbr.rel (%p1389) target = $region88
        $region87: #{tpu_custom_call.1} parent=79 // pred_region
          %s1392 = sand.u32 %s330, 1
          %s1393 = scalar_lea.sflag [#allocation8], %s1392
          %s1394 = sand.u32 %s330, 1
          %s1395 = smul.addr %s1394, 32
          %s1396 = scalar_lea.vmem [#allocation7], %s1395
          %1397 = dma.done %s1393, 512
        $region88: #{tpu_custom_call.1} parent=79 // pred_fallthru
          _
      $region80: #{tpu_custom_call.1} parent=5 // pred_fallthru
        _
    $region6: #{tpu_custom_call.1} parent=1 // loop_footer
      %s30 = sadd.s32 1, %s26
    $region7: #{tpu_custom_call.1} parent=1 // loop_footer_branch
      %25 = sbr.rel target = $region3
    $region8: #{tpu_custom_call.1} parent=1 // loop_exit
      _
    %1398 = vsyncpa [#allocation4], 1
    %s1399 = scalar_lea.sflag [#allocation4], 1
    %1400 = vsyncpa %s1399, 1
    %1401 = vsyncpa [#allocation5], 1
    %s1402 = scalar_lea.sflag [#allocation5], 1
    %1403 = vsyncpa %s1402, 1
    %1404 = vsyncpa [#allocation8], 1
    %s1405 = scalar_lea.sflag [#allocation8], 1
    %1406 = vsyncpa %s1405, 1

</llo_original>
